<compile_context>
chip_gen: v7x
topology: tpu7x:2x2x1
jax: 0.10.0
libtpu: 0.0.40
codegen_flags: <defaults>
</compile_context>

<pallas_src>
import jax
import jax.numpy as jnp
from jax.experimental import pallas as pl
from jax.experimental.pallas import tpu as pltpu

HIDDEN = 64
TILE_B_MAX = 8192     # ~1 MB of f32 x per step at in_features=32
TILE_B_UNIT = 256     # MXU pass height on v6e/v7x; multiple of 8/16 sublanes
MIN_PALLAS_B = 512    # below this, the fused XLA path wins on fixed overhead


def _round_up(x, m):
    return (x + m - 1) // m * m


def _glio_mlp_kernel(x_ref, w1_ref, b1_ref, w2_ref, b2_ref, o_ref):
    # Layer 1: f32 MXU matmul, bias + ReLU on the VPU.
    h = jnp.dot(x_ref[...], w1_ref[...], preferred_element_type=jnp.float32)
    h = jnp.maximum(h + b1_ref[...], 0.0)
    # Dropout(p=0) == identity.
    # Layer 2: f32 MXU matmul + bias, stored at the true class width.
    o = jnp.dot(h, w2_ref[...], preferred_element_type=jnp.float32)
    o_ref[...] = (o + b2_ref[...]).astype(o_ref.dtype)


def _dense_reference(x, w1, b1, w2, b2):
    """Plain fused XLA path; also used as the small-batch fast path."""
    h = jnp.maximum(jnp.dot(x, w1) + b1.reshape(1, -1), 0.0)
    return jnp.dot(h, w2) + b2.reshape(1, -1)


def _choose_tile_b(B):
    # Aim for ~4 grid steps (pipelining) and >=2 steps (v7x megacore), tiles a
    # multiple of 256 rows, capped so per-step VMEM stays small everywhere.
    tile = _round_up(pl.cdiv(B, 4), TILE_B_UNIT)
    return max(TILE_B_UNIT, min(tile, TILE_B_MAX))


def glio_mlp_forward(x, w1, b1, w2, b2, *, min_pallas_batch=MIN_PALLAS_B):
    """x: [B, in_features] f32; w1: [in_features, 64]; b1: [1, 64] (or [64]);
    w2: [64, n_classes]; b2: [1, n_classes] (or [n_classes]) -> [B, n_classes] f32."""
    B, F = x.shape
    H = w1.shape[1]
    C = w2.shape[1]
    b1 = b1.reshape(1, H)  # no-op when init_params already produced (1, H)
    b2 = b2.reshape(1, C)

    if B < min_pallas_batch:
        # Fast path: for a tiny 2-layer MLP at small batch the pallas_call
        # fixed overhead dominates; XLA's fused path is as fast or faster.
        return _dense_reference(x, w1, b1, w2, b2)

    tile_b = _choose_tile_b(B)
    grid = (pl.cdiv(B, tile_b),)

    flops = 2 * B * (F * H + H * C)
    bytes_accessed = (x.size * x.dtype.itemsize          # x read once
                      + (w1.size + b1.size + w2.size + b2.size) * 4
                      + B * C * 4)                        # output at true width

    return pl.pallas_call(
        _glio_mlp_kernel,
        out_shape=jax.ShapeDtypeStruct((B, C), jnp.float32),
        grid=grid,
        in_specs=[
            pl.BlockSpec((tile_b, F), lambda i: (i, 0)),  # x: tiled over batch
            pl.BlockSpec((F, H), lambda i: (0, 0)),       # w1: grid-invariant
            pl.BlockSpec((1, H), lambda i: (0, 0)),       # b1: grid-invariant
            pl.BlockSpec((H, C), lambda i: (0, 0)),       # w2: grid-invariant
            pl.BlockSpec((1, C), lambda i: (0, 0)),       # b2: grid-invariant
        ],
        out_specs=pl.BlockSpec((tile_b, C), lambda i: (i, 0)),
        compiler_params=pltpu.CompilerParams(
            dimension_semantics=("parallel",)),
        cost_estimate=pl.CostEstimate(
            flops=flops, transcendentals=0, bytes_accessed=bytes_accessed),
    )(x, w1, b1, w2, b2)


def init_params(key, in_features, n_classes, hidden=HIDDEN):
    """One-time parameter prep mimicking nn.Linear's uniform(-1/sqrt(fan_in), .)
    init; biases are stored as (1, dim) rows so the forward does no per-call
    reshaping (all weight prep hoisted out of the hot path)."""
    k1, k2, k3, k4 = jax.random.split(key, 4)
    bound1 = 1.0 / jnp.sqrt(in_features)
    bound2 = 1.0 / jnp.sqrt(hidden)
    w1 = jax.random.uniform(k1, (in_features, hidden), jnp.float32, -bound1, bound1)
    b1 = jax.random.uniform(k2, (1, hidden), jnp.float32, -bound1, bound1)
    w2 = jax.random.uniform(k3, (hidden, n_classes), jnp.float32, -bound2, bound2)
    b2 = jax.random.uniform(k4, (1, n_classes), jnp.float32, -bound2, bound2)
    return w1, b1, w2, b2


if __name__ == "__main__":
    in_features = 32
    n_classes = 4

    key = jax.random.PRNGKey(0)
    kx_big, kx_small, kp = jax.random.split(key, 3)
    w1, b1, w2, b2 = init_params(kp, in_features, n_classes)

    # --- Pallas path: batch large enough for the tiled kernel; intentionally
    # not a multiple of the tile so the masked edge block is exercised. ---
    batch_big = 1030
    x_big = jax.random.normal(kx_big, (batch_big, in_features), jnp.float32)
    out_big = jax.block_until_ready(glio_mlp_forward(x_big, w1, b1, w2, b2))
    ref_big = _dense_reference(x_big, w1, b1, w2, b2)
    assert out_big.shape == (batch_big, n_classes)
    # Loose-ish tolerance: Mosaic's and XLA's default f32 matmul paths may use
    # different MXU pass strategies (bf16 multi-pass vs f32); real bugs are
    # O(0.1+) so this still catches them.
    max_err = float(jnp.max(jnp.abs(out_big - ref_big)))
    assert jnp.allclose(out_big, ref_big, atol=5e-2, rtol=5e-2), max_err

    # --- Small-batch fast path (plain fused XLA). ---
    batch_small = 8
    x_small = jax.random.normal(kx_small, (batch_small, in_features), jnp.float32)
    out_small = jax.block_until_ready(glio_mlp_forward(x_small, w1, b1, w2, b2))
    ref_small = _dense_reference(x_small, w1, b1, w2, b2)
    assert out_small.shape == (batch_small, n_classes)
    assert jnp.allclose(out_small, ref_small, atol=5e-2, rtol=5e-2)

    print("KERNEL_OK")
</pallas_src>

<mosaic_0001>
module attributes {stable_mosaic.version = 11 : i64} {
  func.func @_glio_mlp_kernel(%arg0: i32, %arg1: memref<512x32xf32, #tpu.memory_space<vmem>>, %arg2: memref<32x64xf32, #tpu.memory_space<vmem>>, %arg3: memref<1x64xf32, #tpu.memory_space<vmem>>, %arg4: memref<64x4xf32, #tpu.memory_space<vmem>>, %arg5: memref<1x4xf32, #tpu.memory_space<vmem>>, %arg6: memref<512x4xf32, #tpu.memory_space<vmem>>) attributes {dimension_semantics = [#tpu.dimension_semantics<parallel>], iteration_bounds = array<i64: 3>, scalar_prefetch = 0 : i64, scratch_operands = 0 : i64, tpu.core_type = #tpu.core_type<tc>, window_params = [{transform_indices = @transform_0, window_bounds = array<i64: 512, 32>}, {pipeline_mode = #tpu.pipeline_mode<synchronous>, transform_indices = @transform_1, window_bounds = array<i64: 32, 64>}, {pipeline_mode = #tpu.pipeline_mode<synchronous>, transform_indices = @transform_2, window_bounds = array<i64: 1, 64>}, {pipeline_mode = #tpu.pipeline_mode<synchronous>, transform_indices = @transform_3, window_bounds = array<i64: 64, 4>}, {pipeline_mode = #tpu.pipeline_mode<synchronous>, transform_indices = @transform_4, window_bounds = array<i64: 1, 4>}, {transform_indices = @transform_5, window_bounds = array<i64: 512, 4>}]} {
    %c0 = arith.constant 0 : index
    %c0_0 = arith.constant 0 : index
    %0 = vector.load %arg1[%c0, %c0_0] : memref<512x32xf32, #tpu.memory_space<vmem>>, vector<512x32xf32>
    %c0_1 = arith.constant 0 : index
    %c0_2 = arith.constant 0 : index
    %1 = vector.load %arg2[%c0_1, %c0_2] : memref<32x64xf32, #tpu.memory_space<vmem>>, vector<32x64xf32>
    %cst = arith.constant dense<0.000000e+00> : vector<512x64xf32>
    %2 = tpu.matmul %0, %1, %cst {dimension_numbers = #tpu.dot_dimension_numbers<[1], [0], [0], [1], [0, 0, 1, 1], [], []>} : vector<512x32xf32>, vector<32x64xf32>, vector<512x64xf32> -> vector<512x64xf32>
    %c0_3 = arith.constant 0 : index
    %c0_4 = arith.constant 0 : index
    %3 = vector.load %arg3[%c0_3, %c0_4] : memref<1x64xf32, #tpu.memory_space<vmem>>, vector<1x64xf32>
    %4 = vector.broadcast %3 : vector<1x64xf32> to vector<512x64xf32>
    %5 = arith.addf %2, %4 : vector<512x64xf32>
    %cst_5 = arith.constant 0.000000e+00 : f32
    %6 = vector.broadcast %cst_5 : f32 to vector<512x64xf32>
    %7 = arith.maximumf %5, %6 : vector<512x64xf32>
    %c0_6 = arith.constant 0 : index
    %c0_7 = arith.constant 0 : index
    %8 = vector.load %arg4[%c0_6, %c0_7] : memref<64x4xf32, #tpu.memory_space<vmem>>, vector<64x4xf32>
    %cst_8 = arith.constant dense<0.000000e+00> : vector<512x4xf32>
    %9 = tpu.matmul %7, %8, %cst_8 {dimension_numbers = #tpu.dot_dimension_numbers<[1], [0], [0], [1], [0, 0, 1, 1], [], []>} : vector<512x64xf32>, vector<64x4xf32>, vector<512x4xf32> -> vector<512x4xf32>
    %c0_9 = arith.constant 0 : index
    %c0_10 = arith.constant 0 : index
    %10 = vector.load %arg5[%c0_9, %c0_10] : memref<1x4xf32, #tpu.memory_space<vmem>>, vector<1x4xf32>
    %11 = vector.broadcast %10 : vector<1x4xf32> to vector<512x4xf32>
    %12 = arith.addf %9, %11 : vector<512x4xf32>
    %c0_11 = arith.constant 0 : index
    %c0_12 = arith.constant 0 : index
    %13 = vector.load %arg6[%c0_11, %c0_12] : memref<512x4xf32, #tpu.memory_space<vmem>>, vector<512x4xf32>
    tpu.vector_store %arg6[%c0_11, %c0_12], %12 {strides = array<i32>} : memref<512x4xf32, #tpu.memory_space<vmem>>, vector<512x4xf32>,
    return
  }
  func.func @transform_0(%arg0: i32) -> (i32, i32) {
    %c0_i32 = arith.constant 0 : i32
    %c0_i32_0 = arith.constant 0 : i32
    return %arg0, %c0_i32 : i32, i32
  }
  func.func @transform_1(%arg0: i32) -> (i32, i32) {
    %c0_i32 = arith.constant 0 : i32
    %c0_i32_0 = arith.constant 0 : i32
    %c0_i32_1 = arith.constant 0 : i32
    return %c0_i32, %c0_i32_0 : i32, i32
  }
  func.func @transform_2(%arg0: i32) -> (i32, i32) {
    %c0_i32 = arith.constant 0 : i32
    %c0_i32_0 = arith.constant 0 : i32
    %c0_i32_1 = arith.constant 0 : i32
    return %c0_i32, %c0_i32_0 : i32, i32
  }
  func.func @transform_3(%arg0: i32) -> (i32, i32) {
    %c0_i32 = arith.constant 0 : i32
    %c0_i32_0 = arith.constant 0 : i32
    %c0_i32_1 = arith.constant 0 : i32
    return %c0_i32, %c0_i32_0 : i32, i32
  }
  func.func @transform_4(%arg0: i32) -> (i32, i32) {
    %c0_i32 = arith.constant 0 : i32
    %c0_i32_0 = arith.constant 0 : i32
    %c0_i32_1 = arith.constant 0 : i32
    return %c0_i32, %c0_i32_0 : i32, i32
  }
  func.func @transform_5(%arg0: i32) -> (i32, i32) {
    %c0_i32 = arith.constant 0 : i32
    %c0_i32_0 = arith.constant 0 : i32
    return %arg0, %c0_i32 : i32, i32
  }
}

</mosaic_0001>

<llo_original>
// kernel: tpu_custom_call.1
$region0: #{tpu_custom_call.1}
  #allocation0 [shape = 'u32[]', space=smem, size = 0x4, offset = 0x4, fixed_abs, tag = 'smem constant byte address 0x4 - core index']
  #allocation1 [shape = 'u32[144,128]{1,0:T(1,128)}', space=vmem, size = 0x12000, scoped, tag = 'internal scratch']
  %s0 = inlined_call_operand.vmem [shape: f32[1030,32], index: 0, kind: input, shape index: {}]
  %s1 = inlined_call_operand.vmem [shape: f32[32,64], index: 1, kind: input, shape index: {}]
  %s2 = inlined_call_operand.vmem [shape: f32[1,64], index: 2, kind: input, shape index: {}]
  %s3 = inlined_call_operand.vmem [shape: f32[64,4], index: 3, kind: input, shape index: {}]
  %s4 = inlined_call_operand.vmem [shape: f32[1,4], index: 4, kind: input, shape index: {}]
  %s5 = inlined_call_operand.vmem [shape: f32[1030,4], index: 5, kind: output, shape index: {}]
  %s6 = sld [smem:[#allocation0]]
  $region101: #{tpu_custom_call.1} parent=0
    _
  %s8 = ssub.s32 1, %s6
  %s9 = scalar_select 0, %s8, %s6
  $region1: #{tpu_custom_call.1} parent=0
    #allocation2 [shape = 'u8[524288]{0}', space=vmem, size = 0x80000, scoped, tag = 'output window, operand 0']
    loop: start=0, step=1, limit=5
    $region2: #{tpu_custom_call.1} parent=1 // loop_pre_header
      _
    $region3: #{tpu_custom_call.1} parent=1 // loop_header
      %s11 = sphi 0, %s15
      %p12 = scmp.ge.s32.totalorder %s11, 5
      %s21 = sphi 0, %s23
      %s24 = sphi 0, %s21
      %s25 = sphi 0, %s24
      %s41 = sphi 0, %s25
      %s45 = sphi 0, %s45
      %s47 = sphi 0, %s45
      %s48 = sphi 0, %s47
      %s62 = sphi 0, %s48
      %s66 = sphi 0, %s66
      %s68 = sphi 0, %s66
      %s69 = sphi 0, %s68
      %s83 = sphi 0, %s69
      %s87 = sphi 0, %s87
      %s89 = sphi 0, %s87
      %s90 = sphi 0, %s89
      %s104 = sphi 0, %s90
      %s108 = sphi 0, %s108
      %s110 = sphi 0, %s108
      %s111 = sphi 0, %s110
      %s125 = sphi 0, %s111
      %s131 = sphi 0, %s133
      %s134 = sphi 0, %s131
      %s135 = sphi 0, %s134
      %s151 = sphi 0, %s135
    $region4: #{tpu_custom_call.1} parent=1 // loop_header_branch
      %14 = sbr.rel (%p12) target = $region8
    $region5: #{tpu_custom_call.1} parent=1 // loop_body
      %s16 = ssub.s32 %s11, 1
      %s17 = ssub.s32 %s11, 2
      %s18 = sadd.s32 %s11, 1
      %s19 = ssub.s32 %s11, %s18
      %p20 = scmp.eq.s32.totalorder %s19, 0
      %s22 = sadd.s32 %s21, 1
      %s23 = scalar_select %p20, %s21, %s22
      %p26 = pneg %p20
      %p27 = scmp.eq.s32.totalorder %s11, 2
      %p28 = por %p26, %p27
      %p29 = scmp.ne.s32.totalorder %s21, %s24
      %p30 = scmp.eq.s32.totalorder %s11, 0
      %p31 = por %p29, %p30
      %p32 = scmp.ne.s32.totalorder %s21, %s24
      %p33 = scmp.eq.s32.totalorder %s16, 2
      %p34 = por %p32, %p33
      %p35 = scmp.ne.s32.totalorder %s24, %s25
      %p36 = scmp.eq.s32.totalorder %s16, 0
      %p37 = por %p35, %p36
      %p38 = scmp.ne.s32.totalorder %s24, %s25
      %p39 = scmp.eq.s32.totalorder %s17, 2
      %p40 = por %p38, %p39
      %p42 = scmp.ne.s32.totalorder %s25, %s41
      %p43 = scmp.eq.s32.totalorder %s17, 0
      %p44 = por %p42, %p43
      %s46 = sadd.s32 %s45, 1
      %p49 = scmp.eq.s32.totalorder %s11, 2
      %p50 = scmp.ne.s32.totalorder %s45, %s47
      %p51 = scmp.eq.s32.totalorder %s11, 0
      %p52 = por %p50, %p51
      %p53 = scmp.ne.s32.totalorder %s45, %s47
      %p54 = scmp.eq.s32.totalorder %s16, 2
      %p55 = por %p53, %p54
      %p56 = scmp.ne.s32.totalorder %s47, %s48
      %p57 = scmp.eq.s32.totalorder %s16, 0
      %p58 = por %p56, %p57
      %p59 = scmp.ne.s32.totalorder %s47, %s48
      %p60 = scmp.eq.s32.totalorder %s17, 2
      %p61 = por %p59, %p60
      %p63 = scmp.ne.s32.totalorder %s48, %s62
      %p64 = scmp.eq.s32.totalorder %s17, 0
      %p65 = por %p63, %p64
      %s67 = sadd.s32 %s66, 1
      %p70 = scmp.eq.s32.totalorder %s11, 2
      %p71 = scmp.ne.s32.totalorder %s66, %s68
      %p72 = scmp.eq.s32.totalorder %s11, 0
      %p73 = por %p71, %p72
      %p74 = scmp.ne.s32.totalorder %s66, %s68
      %p75 = scmp.eq.s32.totalorder %s16, 2
      %p76 = por %p74, %p75
      %p77 = scmp.ne.s32.totalorder %s68, %s69
      %p78 = scmp.eq.s32.totalorder %s16, 0
      %p79 = por %p77, %p78
      %p80 = scmp.ne.s32.totalorder %s68, %s69
      %p81 = scmp.eq.s32.totalorder %s17, 2
      %p82 = por %p80, %p81
      %p84 = scmp.ne.s32.totalorder %s69, %s83
      %p85 = scmp.eq.s32.totalorder %s17, 0
      %p86 = por %p84, %p85
      %s88 = sadd.s32 %s87, 1
      %p91 = scmp.eq.s32.totalorder %s11, 2
      %p92 = scmp.ne.s32.totalorder %s87, %s89
      %p93 = scmp.eq.s32.totalorder %s11, 0
      %p94 = por %p92, %p93
      %p95 = scmp.ne.s32.totalorder %s87, %s89
      %p96 = scmp.eq.s32.totalorder %s16, 2
      %p97 = por %p95, %p96
      %p98 = scmp.ne.s32.totalorder %s89, %s90
      %p99 = scmp.eq.s32.totalorder %s16, 0
      %p100 = por %p98, %p99
      %p101 = scmp.ne.s32.totalorder %s89, %s90
      %p102 = scmp.eq.s32.totalorder %s17, 2
      %p103 = por %p101, %p102
      %p105 = scmp.ne.s32.totalorder %s90, %s104
      %p106 = scmp.eq.s32.totalorder %s17, 0
      %p107 = por %p105, %p106
      %s109 = sadd.s32 %s108, 1
      %p112 = scmp.eq.s32.totalorder %s11, 2
      %p113 = scmp.ne.s32.totalorder %s108, %s110
      %p114 = scmp.eq.s32.totalorder %s11, 0
      %p115 = por %p113, %p114
      %p116 = scmp.ne.s32.totalorder %s108, %s110
      %p117 = scmp.eq.s32.totalorder %s16, 2
      %p118 = por %p116, %p117
      %p119 = scmp.ne.s32.totalorder %s110, %s111
      %p120 = scmp.eq.s32.totalorder %s16, 0
      %p121 = por %p119, %p120
      %p122 = scmp.ne.s32.totalorder %s110, %s111
      %p123 = scmp.eq.s32.totalorder %s17, 2
      %p124 = por %p122, %p123
      %p126 = scmp.ne.s32.totalorder %s111, %s125
      %p127 = scmp.eq.s32.totalorder %s17, 0
      %p128 = por %p126, %p127
      %s129 = ssub.s32 %s11, %s18
      %p130 = scmp.eq.s32.totalorder %s129, 0
      %s132 = sadd.s32 %s131, 1
      %s133 = scalar_select %p130, %s131, %s132
      %p136 = pneg %p130
      %p137 = scmp.eq.s32.totalorder %s11, 2
      %p138 = por %p136, %p137
      %p139 = scmp.ne.s32.totalorder %s131, %s134
      %p140 = scmp.eq.s32.totalorder %s11, 0
      %p141 = por %p139, %p140
      %p142 = scmp.ne.s32.totalorder %s131, %s134
      %p143 = scmp.eq.s32.totalorder %s16, 2
      %p144 = por %p142, %p143
      %p145 = scmp.ne.s32.totalorder %s134, %s135
      %p146 = scmp.eq.s32.totalorder %s16, 0
      %p147 = por %p145, %p146
      %p148 = scmp.ne.s32.totalorder %s134, %s135
      %p149 = scmp.eq.s32.totalorder %s17, 2
      %p150 = por %p148, %p149
      %p152 = scmp.ne.s32.totalorder %s135, %s151
      %p153 = scmp.eq.s32.totalorder %s17, 0
      %p154 = por %p152, %p153
      %p155 = scmp.le.s32.totalorder 1, %s11
      %p156 = scmp.lt.s32.totalorder %s11, 4
      %p157 = pnand %p155, %p156
      %p158 = pneg %p157
      // Predicated region
      $region9: #{tpu_custom_call.1} parent=5 // pred_check
        _
      $region10: #{tpu_custom_call.1} parent=5 // pred_check_branch
        %160 = sbr.rel (%p157) target = $region12
      $region11: #{tpu_custom_call.1} parent=5 // pred_region
        %s161 = ssub.s32 %s11, 1
        // Predicated region
        $region13: #{tpu_custom_call.1} parent=11 // pred_check
          %p162 = pneg %p58
        $region14: #{tpu_custom_call.1} parent=11 // pred_check_branch
          %164 = sbr.rel (%p162) target = $region16
        $region15: #{tpu_custom_call.1} parent=11 // pred_region
          _
        $region16: #{tpu_custom_call.1} parent=11 // pred_fallthru
          _
        // Predicated region
        $region17: #{tpu_custom_call.1} parent=11 // pred_check
          %p165 = pneg %p79
        $region18: #{tpu_custom_call.1} parent=11 // pred_check_branch
          %167 = sbr.rel (%p165) target = $region20
        $region19: #{tpu_custom_call.1} parent=11 // pred_region
          _
        $region20: #{tpu_custom_call.1} parent=11 // pred_fallthru
          _
        // Predicated region
        $region21: #{tpu_custom_call.1} parent=11 // pred_check
          %p168 = pneg %p100
        $region22: #{tpu_custom_call.1} parent=11 // pred_check_branch
          %170 = sbr.rel (%p168) target = $region24
        $region23: #{tpu_custom_call.1} parent=11 // pred_region
          _
        $region24: #{tpu_custom_call.1} parent=11 // pred_fallthru
          _
        // Predicated region
        $region25: #{tpu_custom_call.1} parent=11 // pred_check
          %p171 = pneg %p121
        $region26: #{tpu_custom_call.1} parent=11 // pred_check_branch
          %173 = sbr.rel (%p171) target = $region28
        $region27: #{tpu_custom_call.1} parent=11 // pred_region
          _
        $region28: #{tpu_custom_call.1} parent=11 // pred_fallthru
          _
      $region12: #{tpu_custom_call.1} parent=5 // pred_fallthru
        _
      %p174 = scmp.lt.s32.totalorder %s11, 3
      // Predicated region
      $region29: #{tpu_custom_call.1} parent=5 // pred_check
        %p175 = pneg %p174
      $region30: #{tpu_custom_call.1} parent=5 // pred_check_branch
        %177 = sbr.rel (%p175) target = $region32
      $region31: #{tpu_custom_call.1} parent=5 // pred_region
        // Predicated region
        $region33: #{tpu_custom_call.1} parent=31 // pred_check
          %p178 = pneg %p31
        $region34: #{tpu_custom_call.1} parent=31 // pred_check_branch
          %180 = sbr.rel (%p178) target = $region36
        $region35: #{tpu_custom_call.1} parent=31 // pred_region
          %s181 = smul.u32 64, %s11
          %s182 = ssub.s32 129, %s181
          %p183 = scmp.lt.s32.totalorder %s182, 64
          %s184 = scalar_select %p183, %s182, 64
          %s185 = smul.u32 128, %s184
          %p186 = scmp.lt.s32.totalorder %s181, 128
          %s187 = scalar_select %p186, %s181, 128
          %s188 = smul.addr %s187, 8
          %s189 = scalar_lea.vmem %s0, %s188
          %s190 = smul.u32 64, %s11
          %s191 = ssub.s32 129, %s190
          %p192 = scmp.lt.s32.totalorder %s191, 64
          %s193 = scalar_select %p192, %s191, 64
          %s194 = smul.u32 128, %s193
        $region36: #{tpu_custom_call.1} parent=31 // pred_fallthru
          _
      $region32: #{tpu_custom_call.1} parent=5 // pred_fallthru
        _
      %p195 = scmp.le.s32.totalorder 1, %s11
      %p196 = scmp.lt.s32.totalorder %s11, 4
      %p197 = pnand %p195, %p196
      %p198 = pneg %p197
      // Predicated region
      $region37: #{tpu_custom_call.1} parent=5 // pred_check
        _
      $region38: #{tpu_custom_call.1} parent=5 // pred_check_branch
        %200 = sbr.rel (%p197) target = $region40
      $region39: #{tpu_custom_call.1} parent=5 // pred_region
        %s201 = ssub.s32 %s11, 1
        %s202 = smul.u32 64, %s16
        %s203 = ssub.s32 129, %s202
        %p204 = scmp.lt.s32.totalorder %s203, 64
        %s205 = scalar_select %p204, %s203, 64
        %s206 = smul.u32 128, %s205
        %p207 = scmp.lt.s32.totalorder %s202, 128
        %s208 = scalar_select %p207, %s202, 128
        %s209 = smul.addr %s208, 8
        %s210 = scalar_lea.vmem %s0, %s209
        %p211 = pneg %p37
        %p212 = pneg %p34
        %p213 = pneg %p58
        %p214 = pneg %p55
        %p215 = pneg %p79
        %p216 = pneg %p76
        %p217 = pneg %p100
        %p218 = pneg %p97
        %p219 = pneg %p121
        %p220 = pneg %p118
        %p221 = pneg %p147
        %p222 = pneg %p144
        %s223 = sand.u32 %s134, 1
        %s224 = sand.u32 %s134, 1
        %s225 = smul.addr %s224, 512
        %s226 = scalar_lea.vmem [#allocation2], %s225
        %s227 = smul.u32 64, %s16
        %s228 = ssub.s32 129, %s227
        %p229 = scmp.lt.s32.totalorder %s228, 64
        %s230 = scalar_select %p229, %s228, 64
        %s231 = smul.u32 128, %s230
        %p232 = scmp.lt.s32.totalorder %s227, 128
        %s233 = scalar_select %p232, %s227, 128
        %s234 = smul.addr %s233, 8
        %s235 = scalar_lea.vmem %s0, %s234
        %s236 = smul.u32 64, %s16
        %s237 = ssub.s32 129, %s236
        %p238 = scmp.lt.s32.totalorder %s237, 64
        %s239 = scalar_select %p238, %s237, 64
        %s240 = smul.u32 128, %s239
        %s241 = smul.u32 64, %s16
        %s242 = ssub.s32 129, %s241
        %p243 = scmp.lt.s32.totalorder %s242, 64
        %s244 = scalar_select %p243, %s242, 64
        %s245 = smul.u32 128, %s244
        %v246 = vld [vmem:[%s235] sm:$0xff]
        %v247 = vld [vmem:[%s235 + $0x8] sm:$0xff]
        %v248 = vld [vmem:[%s235 + $0x10] sm:$0xff]
        %v249 = vld [vmem:[%s235 + $0x18] sm:$0xff]
        %v250 = vld [vmem:[%s235 + $0x20] sm:$0xff]
        %v251 = vld [vmem:[%s235 + $0x28] sm:$0xff]
        %v252 = vld [vmem:[%s235 + $0x30] sm:$0xff]
        %v253 = vld [vmem:[%s235 + $0x38] sm:$0xff]
        %v254 = vld [vmem:[%s235 + $0x40] sm:$0xff]
        %v255 = vld [vmem:[%s235 + $0x48] sm:$0xff]
        %v256 = vld [vmem:[%s235 + $0x50] sm:$0xff]
        %v257 = vld [vmem:[%s235 + $0x58] sm:$0xff]
        %v258 = vld [vmem:[%s235 + $0x60] sm:$0xff]
        %v259 = vld [vmem:[%s235 + $0x68] sm:$0xff]
        %v260 = vld [vmem:[%s235 + $0x70] sm:$0xff]
        %v261 = vld [vmem:[%s235 + $0x78] sm:$0xff]
        %v262 = vld [vmem:[%s235 + $0x80] sm:$0xff]
        %v263 = vld [vmem:[%s235 + $0x88] sm:$0xff]
        %v264 = vld [vmem:[%s235 + $0x90] sm:$0xff]
        %v265 = vld [vmem:[%s235 + $0x98] sm:$0xff]
        %v266 = vld [vmem:[%s235 + $0xa0] sm:$0xff]
        %v267 = vld [vmem:[%s235 + $0xa8] sm:$0xff]
        %v268 = vld [vmem:[%s235 + $0xb0] sm:$0xff]
        %v269 = vld [vmem:[%s235 + $0xb8] sm:$0xff]
        %v270 = vld [vmem:[%s235 + $0xc0] sm:$0xff]
        %v271 = vld [vmem:[%s235 + $0xc8] sm:$0xff]
        %v272 = vld [vmem:[%s235 + $0xd0] sm:$0xff]
        %v273 = vld [vmem:[%s235 + $0xd8] sm:$0xff]
        %v274 = vld [vmem:[%s235 + $0xe0] sm:$0xff]
        %v275 = vld [vmem:[%s235 + $0xe8] sm:$0xff]
        %v276 = vld [vmem:[%s235 + $0xf0] sm:$0xff]
        %v277 = vld [vmem:[%s235 + $0xf8] sm:$0xff]
        %v278 = vld [vmem:[%s235 + $0x100] sm:$0xff]
        %v279 = vld [vmem:[%s235 + $0x108] sm:$0xff]
        %v280 = vld [vmem:[%s235 + $0x110] sm:$0xff]
        %v281 = vld [vmem:[%s235 + $0x118] sm:$0xff]
        %v282 = vld [vmem:[%s235 + $0x120] sm:$0xff]
        %v283 = vld [vmem:[%s235 + $0x128] sm:$0xff]
        %v284 = vld [vmem:[%s235 + $0x130] sm:$0xff]
        %v285 = vld [vmem:[%s235 + $0x138] sm:$0xff]
        %v286 = vld [vmem:[%s235 + $0x140] sm:$0xff]
        %v287 = vld [vmem:[%s235 + $0x148] sm:$0xff]
        %v288 = vld [vmem:[%s235 + $0x150] sm:$0xff]
        %v289 = vld [vmem:[%s235 + $0x158] sm:$0xff]
        %v290 = vld [vmem:[%s235 + $0x160] sm:$0xff]
        %v291 = vld [vmem:[%s235 + $0x168] sm:$0xff]
        %v292 = vld [vmem:[%s235 + $0x170] sm:$0xff]
        %v293 = vld [vmem:[%s235 + $0x178] sm:$0xff]
        %v294 = vld [vmem:[%s235 + $0x180] sm:$0xff]
        %v295 = vld [vmem:[%s235 + $0x188] sm:$0xff]
        %v296 = vld [vmem:[%s235 + $0x190] sm:$0xff]
        %v297 = vld [vmem:[%s235 + $0x198] sm:$0xff]
        %v298 = vld [vmem:[%s235 + $0x1a0] sm:$0xff]
        %v299 = vld [vmem:[%s235 + $0x1a8] sm:$0xff]
        %v300 = vld [vmem:[%s235 + $0x1b0] sm:$0xff]
        %v301 = vld [vmem:[%s235 + $0x1b8] sm:$0xff]
        %v302 = vld [vmem:[%s235 + $0x1c0] sm:$0xff]
        %v303 = vld [vmem:[%s235 + $0x1c8] sm:$0xff]
        %v304 = vld [vmem:[%s235 + $0x1d0] sm:$0xff]
        %v305 = vld [vmem:[%s235 + $0x1d8] sm:$0xff]
        %v306 = vld [vmem:[%s235 + $0x1e0] sm:$0xff]
        %v307 = vld [vmem:[%s235 + $0x1e8] sm:$0xff]
        %v308 = vld [vmem:[%s235 + $0x1f0] sm:$0xff]
        %v309 = vld [vmem:[%s235 + $0x1f8] sm:$0xff]
        %v310 = vld [vmem:[%s1] sm:$0xff]
        %v311 = vld [vmem:[%s1 + $0x8] sm:$0xff]
        %v312 = vld [vmem:[%s1 + $0x10] sm:$0xff]
        %v313 = vld [vmem:[%s1 + $0x18] sm:$0xff]
        %v314 = vld [vmem:[%s2] sm:$0x1]
        %v316 = vlaneseq
        %v317 = vshrl.u32 %v316, 7
        %v318 = vsub.s32 0, %v317
        %v319 = vrot.slane %v314, %v318
        %vm321 = vcmask 261120
        %v323 = vsel %vm321, %v246, 0
        %v326 = vsel %vm321, %v247, 0
        %v329 = vsel %vm321, %v248, 0
        %v332 = vsel %vm321, %v249, 0
        %v335 = vsel %vm321, %v250, 0
        %v338 = vsel %vm321, %v251, 0
        %v341 = vsel %vm321, %v252, 0
        %v344 = vsel %vm321, %v253, 0
        %v347 = vsel %vm321, %v254, 0
        %v350 = vsel %vm321, %v255, 0
        %v353 = vsel %vm321, %v256, 0
        %v356 = vsel %vm321, %v257, 0
        %v359 = vsel %vm321, %v258, 0
        %v362 = vsel %vm321, %v259, 0
        %v365 = vsel %vm321, %v260, 0
        %v368 = vsel %vm321, %v261, 0
        %v371 = vsel %vm321, %v262, 0
        %v374 = vsel %vm321, %v263, 0
        %v377 = vsel %vm321, %v264, 0
        %v380 = vsel %vm321, %v265, 0
        %v383 = vsel %vm321, %v266, 0
        %v386 = vsel %vm321, %v267, 0
        %v389 = vsel %vm321, %v268, 0
        %v392 = vsel %vm321, %v269, 0
        %v395 = vsel %vm321, %v270, 0
        %v398 = vsel %vm321, %v271, 0
        %v401 = vsel %vm321, %v272, 0
        %v404 = vsel %vm321, %v273, 0
        %v407 = vsel %vm321, %v274, 0
        %v410 = vsel %vm321, %v275, 0
        %v413 = vsel %vm321, %v276, 0
        %v416 = vsel %vm321, %v277, 0
        %v419 = vsel %vm321, %v278, 0
        %v422 = vsel %vm321, %v279, 0
        %v425 = vsel %vm321, %v280, 0
        %v428 = vsel %vm321, %v281, 0
        %v431 = vsel %vm321, %v282, 0
        %v434 = vsel %vm321, %v283, 0
        %v437 = vsel %vm321, %v284, 0
        %v440 = vsel %vm321, %v285, 0
        %v443 = vsel %vm321, %v286, 0
        %v446 = vsel %vm321, %v287, 0
        %v449 = vsel %vm321, %v288, 0
        %v452 = vsel %vm321, %v289, 0
        %v455 = vsel %vm321, %v290, 0
        %v458 = vsel %vm321, %v291, 0
        %v461 = vsel %vm321, %v292, 0
        %v464 = vsel %vm321, %v293, 0
        %v467 = vsel %vm321, %v294, 0
        %v470 = vsel %vm321, %v295, 0
        %v473 = vsel %vm321, %v296, 0
        %v476 = vsel %vm321, %v297, 0
        %v479 = vsel %vm321, %v298, 0
        %v482 = vsel %vm321, %v299, 0
        %v485 = vsel %vm321, %v300, 0
        %v488 = vsel %vm321, %v301, 0
        %v491 = vsel %vm321, %v302, 0
        %v494 = vsel %vm321, %v303, 0
        %v497 = vsel %vm321, %v304, 0
        %v500 = vsel %vm321, %v305, 0
        %v503 = vsel %vm321, %v306, 0
        %v506 = vsel %vm321, %v307, 0
        %v509 = vsel %vm321, %v308, 0
        %v512 = vsel %vm321, %v309, 0
        %514 = vmatprep.subr.mxu0 0.0
        %515 = vmatpush1.msra.mxu0 %v310
        %516 = vmatprep.subr.mxu0 0.0
        %517 = vmatpush1.msra.mxu0 %v311
        %518 = vmatprep.subr.mxu0 0.0
        %519 = vmatpush1.msra.mxu0 %v312
        %520 = vmatprep.subr.mxu0 0.0
        %521 = vmatpush1.msra.mxu0 %v313
        %522 = vmatprep.subr.mxu0 0.0
        %523 = vmatpush1.msra.mxu0 0.0
        %524 = vmatprep.subr.mxu0 0.0
        %525 = vmatpush1.msra.mxu0 0.0
        %526 = vmatprep.subr.mxu0 0.0
        %527 = vmatpush1.msra.mxu0 0.0
        %528 = vmatprep.subr.mxu0 0.0
        %529 = vmatpush1.msra.mxu0 0.0
        %530 = vmatprep.subr.mxu0 0.0
        %531 = vmatpush1.msra.mxu0 0.0
        %532 = vmatprep.subr.mxu0 0.0
        %533 = vmatpush1.msra.mxu0 0.0
        %534 = vmatprep.subr.mxu0 0.0
        %535 = vmatpush1.msra.mxu0 0.0
        %536 = vmatprep.subr.mxu0 0.0
        %537 = vmatpush1.msra.mxu0 0.0
        %538 = vmatprep.subr.mxu0 0.0
        %539 = vmatpush1.msra.mxu0 0.0
        %540 = vmatprep.subr.mxu0 0.0
        %541 = vmatpush1.msra.mxu0 0.0
        %542 = vmatprep.subr.mxu0 0.0
        %543 = vmatpush1.msra.mxu0 0.0
        %544 = vmatprep.subr.mxu0 0.0
        %545 = vmatpush1.msra.mxu0 0.0
        %546 = vmatprep.subr.mxu0 0.0
        %547 = vmatpush1.msra.mxu0 0.0
        %548 = vmatprep.subr.mxu0 0.0
        %549 = vmatpush1.msra.mxu0 0.0
        %550 = vmatprep.subr.mxu0 0.0
        %551 = vmatpush1.msra.mxu0 0.0
        %552 = vmatprep.subr.mxu0 0.0
        %553 = vmatpush1.msra.mxu0 0.0
        %554 = vmatprep.subr.mxu0 0.0
        %555 = vmatpush1.msra.mxu0 0.0
        %556 = vmatprep.subr.mxu0 0.0
        %557 = vmatpush1.msra.mxu0 0.0
        %558 = vmatprep.subr.mxu0 0.0
        %559 = vmatpush1.msra.mxu0 0.0
        %560 = vmatprep.subr.mxu0 0.0
        %561 = vmatpush1.msra.mxu0 0.0
        %562 = vmatprep.subr.mxu0 0.0
        %563 = vmatpush1.msra.mxu0 0.0
        %564 = vmatprep.subr.mxu0 0.0
        %565 = vmatpush1.msra.mxu0 0.0
        %566 = vmatprep.subr.mxu0 0.0
        %567 = vmatpush1.msra.mxu0 0.0
        %568 = vmatprep.subr.mxu0 0.0
        %569 = vmatpush1.msra.mxu0 0.0
        %570 = vmatprep.subr.mxu0 0.0
        %571 = vmatpush1.msra.mxu0 0.0
        %572 = vmatprep.subr.mxu0 0.0
        %573 = vmatpush1.msra.mxu0 0.0
        %574 = vmatprep.subr.mxu0 0.0
        %575 = vmatpush1.msra.mxu0 0.0
        %576 = vmatprep.subr.mxu0 0.0
        %577 = vmatpush1.msra.mxu0 0.0
        %578 = vmatprep.mubr.f32.mxu0 0.0
        %579 = vmatmul.mubr.f32.gmra.mrb[0].mxu0 %v323
        %v580 = vpop.f32.mrb[0].mxu0
        %v581 = vadd.f32 %v319, %v580
        %v582 = vpop.f32.mrb[0].mxu0
        %583 = vmatprep.mubr.f32.mxu0 0.0
        %584 = vmatmul.mubr.f32.gmra.mrb[0].mxu0 %v326
        %v585 = vpop.f32.mrb[0].mxu0
        %v586 = vadd.f32 %v319, %v585
        %v587 = vpop.f32.mrb[0].mxu0
        %588 = vmatprep.mubr.f32.mxu0 0.0
        %589 = vmatmul.mubr.f32.gmra.mrb[0].mxu0 %v329
        %v590 = vpop.f32.mrb[0].mxu0
        %v591 = vadd.f32 %v319, %v590
        %v592 = vpop.f32.mrb[0].mxu0
        %593 = vmatprep.mubr.f32.mxu0 0.0
        %594 = vmatmul.mubr.f32.gmra.mrb[0].mxu0 %v332
        %v595 = vpop.f32.mrb[0].mxu0
        %v596 = vadd.f32 %v319, %v595
        %v597 = vpop.f32.mrb[0].mxu0
        %598 = vmatprep.mubr.f32.mxu0 0.0
        %599 = vmatmul.mubr.f32.gmra.mrb[0].mxu0 %v335
        %v600 = vpop.f32.mrb[0].mxu0
        %v601 = vadd.f32 %v319, %v600
        %v602 = vpop.f32.mrb[0].mxu0
        %603 = vmatprep.mubr.f32.mxu0 0.0
        %604 = vmatmul.mubr.f32.gmra.mrb[0].mxu0 %v338
        %v605 = vpop.f32.mrb[0].mxu0
        %v606 = vadd.f32 %v319, %v605
        %v607 = vpop.f32.mrb[0].mxu0
        %608 = vmatprep.mubr.f32.mxu0 0.0
        %609 = vmatmul.mubr.f32.gmra.mrb[0].mxu0 %v341
        %v610 = vpop.f32.mrb[0].mxu0
        %v611 = vadd.f32 %v319, %v610
        %v612 = vpop.f32.mrb[0].mxu0
        %613 = vmatprep.mubr.f32.mxu0 0.0
        %614 = vmatmul.mubr.f32.gmra.mrb[0].mxu0 %v344
        %v615 = vpop.f32.mrb[0].mxu0
        %v616 = vadd.f32 %v319, %v615
        %v617 = vpop.f32.mrb[0].mxu0
        %618 = vmatprep.mubr.f32.mxu0 0.0
        %619 = vmatmul.mubr.f32.gmra.mrb[0].mxu0 %v347
        %v620 = vpop.f32.mrb[0].mxu0
        %v621 = vadd.f32 %v319, %v620
        %v622 = vpop.f32.mrb[0].mxu0
        %623 = vmatprep.mubr.f32.mxu0 0.0
        %624 = vmatmul.mubr.f32.gmra.mrb[0].mxu0 %v350
        %v625 = vpop.f32.mrb[0].mxu0
        %v626 = vadd.f32 %v319, %v625
        %v627 = vpop.f32.mrb[0].mxu0
        %628 = vmatprep.mubr.f32.mxu0 0.0
        %629 = vmatmul.mubr.f32.gmra.mrb[0].mxu0 %v353
        %v630 = vpop.f32.mrb[0].mxu0
        %v631 = vadd.f32 %v319, %v630
        %v632 = vpop.f32.mrb[0].mxu0
        %633 = vmatprep.mubr.f32.mxu0 0.0
        %634 = vmatmul.mubr.f32.gmra.mrb[0].mxu0 %v356
        %v635 = vpop.f32.mrb[0].mxu0
        %v636 = vadd.f32 %v319, %v635
        %v637 = vpop.f32.mrb[0].mxu0
        %638 = vmatprep.mubr.f32.mxu0 0.0
        %639 = vmatmul.mubr.f32.gmra.mrb[0].mxu0 %v359
        %v640 = vpop.f32.mrb[0].mxu0
        %v641 = vadd.f32 %v319, %v640
        %v642 = vpop.f32.mrb[0].mxu0
        %643 = vmatprep.mubr.f32.mxu0 0.0
        %644 = vmatmul.mubr.f32.gmra.mrb[0].mxu0 %v362
        %v645 = vpop.f32.mrb[0].mxu0
        %v646 = vadd.f32 %v319, %v645
        %v647 = vpop.f32.mrb[0].mxu0
        %648 = vmatprep.mubr.f32.mxu0 0.0
        %649 = vmatmul.mubr.f32.gmra.mrb[0].mxu0 %v365
        %v650 = vpop.f32.mrb[0].mxu0
        %v651 = vadd.f32 %v319, %v650
        %v652 = vpop.f32.mrb[0].mxu0
        %653 = vmatprep.mubr.f32.mxu0 0.0
        %654 = vmatmul.mubr.f32.gmra.mrb[0].mxu0 %v368
        %v655 = vpop.f32.mrb[0].mxu0
        %v656 = vadd.f32 %v319, %v655
        %v657 = vpop.f32.mrb[0].mxu0
        %658 = vmatprep.mubr.f32.mxu0 0.0
        %659 = vmatmul.mubr.f32.gmra.mrb[0].mxu0 %v371
        %v660 = vpop.f32.mrb[0].mxu0
        %v661 = vadd.f32 %v319, %v660
        %v662 = vpop.f32.mrb[0].mxu0
        %663 = vmatprep.mubr.f32.mxu0 0.0
        %664 = vmatmul.mubr.f32.gmra.mrb[0].mxu0 %v374
        %v665 = vpop.f32.mrb[0].mxu0
        %v666 = vadd.f32 %v319, %v665
        %v667 = vpop.f32.mrb[0].mxu0
        %668 = vmatprep.mubr.f32.mxu0 0.0
        %669 = vmatmul.mubr.f32.gmra.mrb[0].mxu0 %v377
        %v670 = vpop.f32.mrb[0].mxu0
        %v671 = vadd.f32 %v319, %v670
        %v672 = vpop.f32.mrb[0].mxu0
        %673 = vmatprep.mubr.f32.mxu0 0.0
        %674 = vmatmul.mubr.f32.gmra.mrb[0].mxu0 %v380
        %v675 = vpop.f32.mrb[0].mxu0
        %v676 = vadd.f32 %v319, %v675
        %v677 = vpop.f32.mrb[0].mxu0
        %678 = vmatprep.mubr.f32.mxu0 0.0
        %679 = vmatmul.mubr.f32.gmra.mrb[0].mxu0 %v383
        %v680 = vpop.f32.mrb[0].mxu0
        %v681 = vadd.f32 %v319, %v680
        %v682 = vpop.f32.mrb[0].mxu0
        %683 = vmatprep.mubr.f32.mxu0 0.0
        %684 = vmatmul.mubr.f32.gmra.mrb[0].mxu0 %v386
        %v685 = vpop.f32.mrb[0].mxu0
        %v686 = vadd.f32 %v319, %v685
        %v687 = vpop.f32.mrb[0].mxu0
        %688 = vmatprep.mubr.f32.mxu0 0.0
        %689 = vmatmul.mubr.f32.gmra.mrb[0].mxu0 %v389
        %v690 = vpop.f32.mrb[0].mxu0
        %v691 = vadd.f32 %v319, %v690
        %v692 = vpop.f32.mrb[0].mxu0
        %693 = vmatprep.mubr.f32.mxu0 0.0
        %694 = vmatmul.mubr.f32.gmra.mrb[0].mxu0 %v392
        %v695 = vpop.f32.mrb[0].mxu0
        %v696 = vadd.f32 %v319, %v695
        %v697 = vpop.f32.mrb[0].mxu0
        %698 = vmatprep.mubr.f32.mxu0 0.0
        %699 = vmatmul.mubr.f32.gmra.mrb[0].mxu0 %v395
        %v700 = vpop.f32.mrb[0].mxu0
        %v701 = vadd.f32 %v319, %v700
        %v702 = vpop.f32.mrb[0].mxu0
        %703 = vmatprep.mubr.f32.mxu0 0.0
        %704 = vmatmul.mubr.f32.gmra.mrb[0].mxu0 %v398
        %v705 = vpop.f32.mrb[0].mxu0
        %v706 = vadd.f32 %v319, %v705
        %v707 = vpop.f32.mrb[0].mxu0
        %708 = vmatprep.mubr.f32.mxu0 0.0
        %709 = vmatmul.mubr.f32.gmra.mrb[0].mxu0 %v401
        %v710 = vpop.f32.mrb[0].mxu0
        %v711 = vadd.f32 %v319, %v710
        %v712 = vpop.f32.mrb[0].mxu0
        %713 = vmatprep.mubr.f32.mxu0 0.0
        %714 = vmatmul.mubr.f32.gmra.mrb[0].mxu0 %v404
        %v715 = vpop.f32.mrb[0].mxu0
        %v716 = vadd.f32 %v319, %v715
        %v717 = vpop.f32.mrb[0].mxu0
        %718 = vmatprep.mubr.f32.mxu0 0.0
        %719 = vmatmul.mubr.f32.gmra.mrb[0].mxu0 %v407
        %v720 = vpop.f32.mrb[0].mxu0
        %v721 = vadd.f32 %v319, %v720
        %v722 = vpop.f32.mrb[0].mxu0
        %723 = vmatprep.mubr.f32.mxu0 0.0
        %724 = vmatmul.mubr.f32.gmra.mrb[0].mxu0 %v410
        %v725 = vpop.f32.mrb[0].mxu0
        %v726 = vadd.f32 %v319, %v725
        %v727 = vpop.f32.mrb[0].mxu0
        %728 = vmatprep.mubr.f32.mxu0 0.0
        %729 = vmatmul.mubr.f32.gmra.mrb[0].mxu0 %v413
        %v730 = vpop.f32.mrb[0].mxu0
        %v731 = vadd.f32 %v319, %v730
        %v732 = vpop.f32.mrb[0].mxu0
        %733 = vmatprep.mubr.f32.mxu0 0.0
        %734 = vmatmul.mubr.f32.gmra.mrb[0].mxu0 %v416
        %v735 = vpop.f32.mrb[0].mxu0
        %v736 = vadd.f32 %v319, %v735
        %v737 = vpop.f32.mrb[0].mxu0
        %738 = vmatprep.mubr.f32.mxu0 0.0
        %739 = vmatmul.mubr.f32.gmra.mrb[0].mxu0 %v419
        %v740 = vpop.f32.mrb[0].mxu0
        %v741 = vadd.f32 %v319, %v740
        %v742 = vpop.f32.mrb[0].mxu0
        %743 = vmatprep.mubr.f32.mxu0 0.0
        %744 = vmatmul.mubr.f32.gmra.mrb[0].mxu0 %v422
        %v745 = vpop.f32.mrb[0].mxu0
        %v746 = vadd.f32 %v319, %v745
        %v747 = vpop.f32.mrb[0].mxu0
        %748 = vmatprep.mubr.f32.mxu0 0.0
        %749 = vmatmul.mubr.f32.gmra.mrb[0].mxu0 %v425
        %v750 = vpop.f32.mrb[0].mxu0
        %v751 = vadd.f32 %v319, %v750
        %v752 = vpop.f32.mrb[0].mxu0
        %753 = vmatprep.mubr.f32.mxu0 0.0
        %754 = vmatmul.mubr.f32.gmra.mrb[0].mxu0 %v428
        %v755 = vpop.f32.mrb[0].mxu0
        %v756 = vadd.f32 %v319, %v755
        %v757 = vpop.f32.mrb[0].mxu0
        %758 = vmatprep.mubr.f32.mxu0 0.0
        %759 = vmatmul.mubr.f32.gmra.mrb[0].mxu0 %v431
        %v760 = vpop.f32.mrb[0].mxu0
        %v761 = vadd.f32 %v319, %v760
        %v762 = vpop.f32.mrb[0].mxu0
        %763 = vmatprep.mubr.f32.mxu0 0.0
        %764 = vmatmul.mubr.f32.gmra.mrb[0].mxu0 %v434
        %v765 = vpop.f32.mrb[0].mxu0
        %v766 = vadd.f32 %v319, %v765
        %v767 = vpop.f32.mrb[0].mxu0
        %768 = vmatprep.mubr.f32.mxu0 0.0
        %769 = vmatmul.mubr.f32.gmra.mrb[0].mxu0 %v437
        %v770 = vpop.f32.mrb[0].mxu0
        %v771 = vadd.f32 %v319, %v770
        %v772 = vpop.f32.mrb[0].mxu0
        %773 = vmatprep.mubr.f32.mxu0 0.0
        %774 = vmatmul.mubr.f32.gmra.mrb[0].mxu0 %v440
        %v775 = vpop.f32.mrb[0].mxu0
        %v776 = vadd.f32 %v319, %v775
        %v777 = vpop.f32.mrb[0].mxu0
        %778 = vmatprep.mubr.f32.mxu0 0.0
        %779 = vmatmul.mubr.f32.gmra.mrb[0].mxu0 %v443
        %v780 = vpop.f32.mrb[0].mxu0
        %v781 = vadd.f32 %v319, %v780
        %v782 = vpop.f32.mrb[0].mxu0
        %783 = vmatprep.mubr.f32.mxu0 0.0
        %784 = vmatmul.mubr.f32.gmra.mrb[0].mxu0 %v446
        %v785 = vpop.f32.mrb[0].mxu0
        %v786 = vadd.f32 %v319, %v785
        %v787 = vpop.f32.mrb[0].mxu0
        %788 = vmatprep.mubr.f32.mxu0 0.0
        %789 = vmatmul.mubr.f32.gmra.mrb[0].mxu0 %v449
        %v790 = vpop.f32.mrb[0].mxu0
        %v791 = vadd.f32 %v319, %v790
        %v792 = vpop.f32.mrb[0].mxu0
        %793 = vmatprep.mubr.f32.mxu0 0.0
        %794 = vmatmul.mubr.f32.gmra.mrb[0].mxu0 %v452
        %v795 = vpop.f32.mrb[0].mxu0
        %v796 = vadd.f32 %v319, %v795
        %v797 = vpop.f32.mrb[0].mxu0
        %798 = vmatprep.mubr.f32.mxu0 0.0
        %799 = vmatmul.mubr.f32.gmra.mrb[0].mxu0 %v455
        %v800 = vpop.f32.mrb[0].mxu0
        %v801 = vadd.f32 %v319, %v800
        %v802 = vpop.f32.mrb[0].mxu0
        %803 = vmatprep.mubr.f32.mxu0 0.0
        %804 = vmatmul.mubr.f32.gmra.mrb[0].mxu0 %v458
        %v805 = vpop.f32.mrb[0].mxu0
        %v806 = vadd.f32 %v319, %v805
        %v807 = vpop.f32.mrb[0].mxu0
        %808 = vmatprep.mubr.f32.mxu0 0.0
        %809 = vmatmul.mubr.f32.gmra.mrb[0].mxu0 %v461
        %v810 = vpop.f32.mrb[0].mxu0
        %v811 = vadd.f32 %v319, %v810
        %v812 = vpop.f32.mrb[0].mxu0
        %813 = vmatprep.mubr.f32.mxu0 0.0
        %814 = vmatmul.mubr.f32.gmra.mrb[0].mxu0 %v464
        %v815 = vpop.f32.mrb[0].mxu0
        %v816 = vadd.f32 %v319, %v815
        %v817 = vpop.f32.mrb[0].mxu0
        %818 = vmatprep.mubr.f32.mxu0 0.0
        %819 = vmatmul.mubr.f32.gmra.mrb[0].mxu0 %v467
        %v820 = vpop.f32.mrb[0].mxu0
        %v821 = vadd.f32 %v319, %v820
        %v822 = vpop.f32.mrb[0].mxu0
        %823 = vmatprep.mubr.f32.mxu0 0.0
        %824 = vmatmul.mubr.f32.gmra.mrb[0].mxu0 %v470
        %v825 = vpop.f32.mrb[0].mxu0
        %v826 = vadd.f32 %v319, %v825
        %v827 = vpop.f32.mrb[0].mxu0
        %828 = vmatprep.mubr.f32.mxu0 0.0
        %829 = vmatmul.mubr.f32.gmra.mrb[0].mxu0 %v473
        %v830 = vpop.f32.mrb[0].mxu0
        %v831 = vadd.f32 %v319, %v830
        %v832 = vpop.f32.mrb[0].mxu0
        %833 = vmatprep.mubr.f32.mxu0 0.0
        %834 = vmatmul.mubr.f32.gmra.mrb[0].mxu0 %v476
        %v835 = vpop.f32.mrb[0].mxu0
        %v836 = vadd.f32 %v319, %v835
        %v837 = vpop.f32.mrb[0].mxu0
        %838 = vmatprep.mubr.f32.mxu0 0.0
        %839 = vmatmul.mubr.f32.gmra.mrb[0].mxu0 %v479
        %v840 = vpop.f32.mrb[0].mxu0
        %v841 = vadd.f32 %v319, %v840
        %v842 = vpop.f32.mrb[0].mxu0
        %843 = vmatprep.mubr.f32.mxu0 0.0
        %844 = vmatmul.mubr.f32.gmra.mrb[0].mxu0 %v482
        %v845 = vpop.f32.mrb[0].mxu0
        %v846 = vadd.f32 %v319, %v845
        %v847 = vpop.f32.mrb[0].mxu0
        %848 = vmatprep.mubr.f32.mxu0 0.0
        %849 = vmatmul.mubr.f32.gmra.mrb[0].mxu0 %v485
        %v850 = vpop.f32.mrb[0].mxu0
        %v851 = vadd.f32 %v319, %v850
        %v852 = vpop.f32.mrb[0].mxu0
        %853 = vmatprep.mubr.f32.mxu0 0.0
        %854 = vmatmul.mubr.f32.gmra.mrb[0].mxu0 %v488
        %v855 = vpop.f32.mrb[0].mxu0
        %v856 = vadd.f32 %v319, %v855
        %v857 = vpop.f32.mrb[0].mxu0
        %858 = vmatprep.mubr.f32.mxu0 0.0
        %859 = vmatmul.mubr.f32.gmra.mrb[0].mxu0 %v491
        %v860 = vpop.f32.mrb[0].mxu0
        %v861 = vadd.f32 %v319, %v860
        %v862 = vpop.f32.mrb[0].mxu0
        %863 = vmatprep.mubr.f32.mxu0 0.0
        %864 = vmatmul.mubr.f32.gmra.mrb[0].mxu0 %v494
        %v865 = vpop.f32.mrb[0].mxu0
        %v866 = vadd.f32 %v319, %v865
        %v867 = vpop.f32.mrb[0].mxu0
        %868 = vmatprep.mubr.f32.mxu0 0.0
        %869 = vmatmul.mubr.f32.gmra.mrb[0].mxu0 %v497
        %v870 = vpop.f32.mrb[0].mxu0
        %v871 = vadd.f32 %v319, %v870
        %v872 = vpop.f32.mrb[0].mxu0
        %873 = vmatprep.mubr.f32.mxu0 0.0
        %874 = vmatmul.mubr.f32.gmra.mrb[0].mxu0 %v500
        %v875 = vpop.f32.mrb[0].mxu0
        %v876 = vadd.f32 %v319, %v875
        %v877 = vpop.f32.mrb[0].mxu0
        %878 = vmatprep.mubr.f32.mxu0 0.0
        %879 = vmatmul.mubr.f32.gmra.mrb[0].mxu0 %v503
        %v880 = vpop.f32.mrb[0].mxu0
        %v881 = vadd.f32 %v319, %v880
        %v882 = vpop.f32.mrb[0].mxu0
        %883 = vmatprep.mubr.f32.mxu0 0.0
        %884 = vmatmul.mubr.f32.gmra.mrb[0].mxu0 %v506
        %v885 = vpop.f32.mrb[0].mxu0
        %v886 = vadd.f32 %v319, %v885
        %v887 = vpop.f32.mrb[0].mxu0
        %888 = vmatprep.mubr.f32.mxu0 0.0
        %889 = vmatmul.mubr.f32.gmra.mrb[0].mxu0 %v509
        %v890 = vpop.f32.mrb[0].mxu0
        %v891 = vadd.f32 %v319, %v890
        %v892 = vpop.f32.mrb[0].mxu0
        %893 = vmatprep.mubr.f32.mxu0 0.0
        %894 = vmatmul.mubr.f32.gmra.mrb[0].mxu0 %v512
        %v895 = vpop.f32.mrb[0].mxu0
        %v896 = vadd.f32 %v319, %v895
        %v897 = vpop.f32.mrb[0].mxu0
        %898 = vdwg.mxu0
        %v899 = vmax.f32 %v581, 0.0
        %v900 = vmax.f32 %v586, 0.0
        %v901 = vmax.f32 %v591, 0.0
        %v902 = vmax.f32 %v596, 0.0
        %v903 = vmax.f32 %v601, 0.0
        %v904 = vmax.f32 %v606, 0.0
        %v905 = vmax.f32 %v611, 0.0
        %v906 = vmax.f32 %v616, 0.0
        %v907 = vmax.f32 %v621, 0.0
        %v908 = vmax.f32 %v626, 0.0
        %v909 = vmax.f32 %v631, 0.0
        %v910 = vmax.f32 %v636, 0.0
        %v911 = vmax.f32 %v641, 0.0
        %v912 = vmax.f32 %v646, 0.0
        %v913 = vmax.f32 %v651, 0.0
        %v914 = vmax.f32 %v656, 0.0
        %v915 = vmax.f32 %v661, 0.0
        %v916 = vmax.f32 %v666, 0.0
        %v917 = vmax.f32 %v671, 0.0
        %v918 = vmax.f32 %v676, 0.0
        %v919 = vmax.f32 %v681, 0.0
        %v920 = vmax.f32 %v686, 0.0
        %v921 = vmax.f32 %v691, 0.0
        %v922 = vmax.f32 %v696, 0.0
        %v923 = vmax.f32 %v701, 0.0
        %v924 = vmax.f32 %v706, 0.0
        %v925 = vmax.f32 %v711, 0.0
        %v926 = vmax.f32 %v716, 0.0
        %v927 = vmax.f32 %v721, 0.0
        %v928 = vmax.f32 %v726, 0.0
        %v929 = vmax.f32 %v731, 0.0
        %v930 = vmax.f32 %v736, 0.0
        %v931 = vmax.f32 %v741, 0.0
        %v932 = vmax.f32 %v746, 0.0
        %v933 = vmax.f32 %v751, 0.0
        %v934 = vmax.f32 %v756, 0.0
        %v935 = vmax.f32 %v761, 0.0
        %v936 = vmax.f32 %v766, 0.0
        %v937 = vmax.f32 %v771, 0.0
        %v938 = vmax.f32 %v776, 0.0
        %v939 = vmax.f32 %v781, 0.0
        %v940 = vmax.f32 %v786, 0.0
        %v941 = vmax.f32 %v791, 0.0
        %v942 = vmax.f32 %v796, 0.0
        %v943 = vmax.f32 %v801, 0.0
        %v944 = vmax.f32 %v806, 0.0
        %v945 = vmax.f32 %v811, 0.0
        %v946 = vmax.f32 %v816, 0.0
        %v947 = vmax.f32 %v821, 0.0
        %v948 = vmax.f32 %v826, 0.0
        %v949 = vmax.f32 %v831, 0.0
        %v950 = vmax.f32 %v836, 0.0
        %v951 = vmax.f32 %v841, 0.0
        %v952 = vmax.f32 %v846, 0.0
        %v953 = vmax.f32 %v851, 0.0
        %v954 = vmax.f32 %v856, 0.0
        %v955 = vmax.f32 %v861, 0.0
        %v956 = vmax.f32 %v866, 0.0
        %v957 = vmax.f32 %v871, 0.0
        %v958 = vmax.f32 %v876, 0.0
        %v959 = vmax.f32 %v881, 0.0
        %v960 = vmax.f32 %v886, 0.0
        %v961 = vmax.f32 %v891, 0.0
        %v962 = vmax.f32 %v896, 0.0
        %v963 = vld [vmem:[%s3] sm:$0xff]
        %v964 = vld [vmem:[%s3 + $0x8] sm:$0xff]
        %v965 = vld [vmem:[%s3 + $0x10] sm:$0xff]
        %v966 = vld [vmem:[%s3 + $0x18] sm:$0xff]
        %v967 = vld [vmem:[%s3 + $0x20] sm:$0xff]
        %v968 = vld [vmem:[%s3 + $0x28] sm:$0xff]
        %v969 = vld [vmem:[%s3 + $0x30] sm:$0xff]
        %v970 = vld [vmem:[%s3 + $0x38] sm:$0xff]
        %v971 = vld [vmem:[%s4] sm:$0x1]
        %v973 = vlaneseq
        %v974 = vshrl.u32 %v973, 7
        %v975 = vsub.s32 0, %v974
        %v976 = vrot.slane %v971, %v975
        %vm978 = vcmask 523264
        %v980 = vsel %vm978, %v899, 0
        %v983 = vsel %vm978, %v900, 0
        %v986 = vsel %vm978, %v901, 0
        %v989 = vsel %vm978, %v902, 0
        %v992 = vsel %vm978, %v903, 0
        %v995 = vsel %vm978, %v904, 0
        %v998 = vsel %vm978, %v905, 0
        %v1001 = vsel %vm978, %v906, 0
        %v1004 = vsel %vm978, %v907, 0
        %v1007 = vsel %vm978, %v908, 0
        %v1010 = vsel %vm978, %v909, 0
        %v1013 = vsel %vm978, %v910, 0
        %v1016 = vsel %vm978, %v911, 0
        %v1019 = vsel %vm978, %v912, 0
        %v1022 = vsel %vm978, %v913, 0
        %v1025 = vsel %vm978, %v914, 0
        %v1028 = vsel %vm978, %v915, 0
        %v1031 = vsel %vm978, %v916, 0
        %v1034 = vsel %vm978, %v917, 0
        %v1037 = vsel %vm978, %v918, 0
        %v1040 = vsel %vm978, %v919, 0
        %v1043 = vsel %vm978, %v920, 0
        %v1046 = vsel %vm978, %v921, 0
        %v1049 = vsel %vm978, %v922, 0
        %v1052 = vsel %vm978, %v923, 0
        %v1055 = vsel %vm978, %v924, 0
        %v1058 = vsel %vm978, %v925, 0
        %v1061 = vsel %vm978, %v926, 0
        %v1064 = vsel %vm978, %v927, 0
        %v1067 = vsel %vm978, %v928, 0
        %v1070 = vsel %vm978, %v929, 0
        %v1073 = vsel %vm978, %v930, 0
        %v1076 = vsel %vm978, %v931, 0
        %v1079 = vsel %vm978, %v932, 0
        %v1082 = vsel %vm978, %v933, 0
        %v1085 = vsel %vm978, %v934, 0
        %v1088 = vsel %vm978, %v935, 0
        %v1091 = vsel %vm978, %v936, 0
        %v1094 = vsel %vm978, %v937, 0
        %v1097 = vsel %vm978, %v938, 0
        %v1100 = vsel %vm978, %v939, 0
        %v1103 = vsel %vm978, %v940, 0
        %v1106 = vsel %vm978, %v941, 0
        %v1109 = vsel %vm978, %v942, 0
        %v1112 = vsel %vm978, %v943, 0
        %v1115 = vsel %vm978, %v944, 0
        %v1118 = vsel %vm978, %v945, 0
        %v1121 = vsel %vm978, %v946, 0
        %v1124 = vsel %vm978, %v947, 0
        %v1127 = vsel %vm978, %v948, 0
        %v1130 = vsel %vm978, %v949, 0
        %v1133 = vsel %vm978, %v950, 0
        %v1136 = vsel %vm978, %v951, 0
        %v1139 = vsel %vm978, %v952, 0
        %v1142 = vsel %vm978, %v953, 0
        %v1145 = vsel %vm978, %v954, 0
        %v1148 = vsel %vm978, %v955, 0
        %v1151 = vsel %vm978, %v956, 0
        %v1154 = vsel %vm978, %v957, 0
        %v1157 = vsel %vm978, %v958, 0
        %v1160 = vsel %vm978, %v959, 0
        %v1163 = vsel %vm978, %v960, 0
        %v1166 = vsel %vm978, %v961, 0
        %v1169 = vsel %vm978, %v962, 0
        %1171 = vmatprep.subr.mxu0 0.0
        %1172 = vmatpush1.msra.mxu0 %v963
        %1173 = vmatprep.subr.mxu0 0.0
        %1174 = vmatpush1.msra.mxu0 %v964
        %1175 = vmatprep.subr.mxu0 0.0
        %1176 = vmatpush1.msra.mxu0 %v965
        %1177 = vmatprep.subr.mxu0 0.0
        %1178 = vmatpush1.msra.mxu0 %v966
        %1179 = vmatprep.subr.mxu0 0.0
        %1180 = vmatpush1.msra.mxu0 %v967
        %1181 = vmatprep.subr.mxu0 0.0
        %1182 = vmatpush1.msra.mxu0 %v968
        %1183 = vmatprep.subr.mxu0 0.0
        %1184 = vmatpush1.msra.mxu0 %v969
        %1185 = vmatprep.subr.mxu0 0.0
        %1186 = vmatpush1.msra.mxu0 %v970
        %1187 = vmatprep.subr.mxu0 0.0
        %1188 = vmatpush1.msra.mxu0 0.0
        %1189 = vmatprep.subr.mxu0 0.0
        %1190 = vmatpush1.msra.mxu0 0.0
        %1191 = vmatprep.subr.mxu0 0.0
        %1192 = vmatpush1.msra.mxu0 0.0
        %1193 = vmatprep.subr.mxu0 0.0
        %1194 = vmatpush1.msra.mxu0 0.0
        %1195 = vmatprep.subr.mxu0 0.0
        %1196 = vmatpush1.msra.mxu0 0.0
        %1197 = vmatprep.subr.mxu0 0.0
        %1198 = vmatpush1.msra.mxu0 0.0
        %1199 = vmatprep.subr.mxu0 0.0
        %1200 = vmatpush1.msra.mxu0 0.0
        %1201 = vmatprep.subr.mxu0 0.0
        %1202 = vmatpush1.msra.mxu0 0.0
        %1203 = vmatprep.subr.mxu0 0.0
        %1204 = vmatpush1.msra.mxu0 0.0
        %1205 = vmatprep.subr.mxu0 0.0
        %1206 = vmatpush1.msra.mxu0 0.0
        %1207 = vmatprep.subr.mxu0 0.0
        %1208 = vmatpush1.msra.mxu0 0.0
        %1209 = vmatprep.subr.mxu0 0.0
        %1210 = vmatpush1.msra.mxu0 0.0
        %1211 = vmatprep.subr.mxu0 0.0
        %1212 = vmatpush1.msra.mxu0 0.0
        %1213 = vmatprep.subr.mxu0 0.0
        %1214 = vmatpush1.msra.mxu0 0.0
        %1215 = vmatprep.subr.mxu0 0.0
        %1216 = vmatpush1.msra.mxu0 0.0
        %1217 = vmatprep.subr.mxu0 0.0
        %1218 = vmatpush1.msra.mxu0 0.0
        %1219 = vmatprep.subr.mxu0 0.0
        %1220 = vmatpush1.msra.mxu0 0.0
        %1221 = vmatprep.subr.mxu0 0.0
        %1222 = vmatpush1.msra.mxu0 0.0
        %1223 = vmatprep.subr.mxu0 0.0
        %1224 = vmatpush1.msra.mxu0 0.0
        %1225 = vmatprep.subr.mxu0 0.0
        %1226 = vmatpush1.msra.mxu0 0.0
        %1227 = vmatprep.subr.mxu0 0.0
        %1228 = vmatpush1.msra.mxu0 0.0
        %1229 = vmatprep.subr.mxu0 0.0
        %1230 = vmatpush1.msra.mxu0 0.0
        %1231 = vmatprep.subr.mxu0 0.0
        %1232 = vmatpush1.msra.mxu0 0.0
        %1233 = vmatprep.subr.mxu0 0.0
        %1234 = vmatpush1.msra.mxu0 0.0
        %1235 = vmatprep.mubr.f32.mxu0 0.0
        %1236 = vmatmul.mubr.f32.gmra.mrb[0].mxu0 %v980
        %v1237 = vpop.f32.mrb[0].mxu0
        %v1238 = vadd.f32 %v976, %v1237
        %v1239 = vpop.f32.mrb[0].mxu0
        %1240 = vmatprep.mubr.f32.mxu0 0.0
        %1241 = vmatmul.mubr.f32.gmra.mrb[0].mxu0 %v983
        %v1242 = vpop.f32.mrb[0].mxu0
        %v1243 = vadd.f32 %v976, %v1242
        %v1244 = vpop.f32.mrb[0].mxu0
        %1245 = vmatprep.mubr.f32.mxu0 0.0
        %1246 = vmatmul.mubr.f32.gmra.mrb[0].mxu0 %v986
        %v1247 = vpop.f32.mrb[0].mxu0
        %v1248 = vadd.f32 %v976, %v1247
        %v1249 = vpop.f32.mrb[0].mxu0
        %1250 = vmatprep.mubr.f32.mxu0 0.0
        %1251 = vmatmul.mubr.f32.gmra.mrb[0].mxu0 %v989
        %v1252 = vpop.f32.mrb[0].mxu0
        %v1253 = vadd.f32 %v976, %v1252
        %v1254 = vpop.f32.mrb[0].mxu0
        %1255 = vmatprep.mubr.f32.mxu0 0.0
        %1256 = vmatmul.mubr.f32.gmra.mrb[0].mxu0 %v992
        %v1257 = vpop.f32.mrb[0].mxu0
        %v1258 = vadd.f32 %v976, %v1257
        %v1259 = vpop.f32.mrb[0].mxu0
        %1260 = vmatprep.mubr.f32.mxu0 0.0
        %1261 = vmatmul.mubr.f32.gmra.mrb[0].mxu0 %v995
        %v1262 = vpop.f32.mrb[0].mxu0
        %v1263 = vadd.f32 %v976, %v1262
        %v1264 = vpop.f32.mrb[0].mxu0
        %1265 = vmatprep.mubr.f32.mxu0 0.0
        %1266 = vmatmul.mubr.f32.gmra.mrb[0].mxu0 %v998
        %v1267 = vpop.f32.mrb[0].mxu0
        %v1268 = vadd.f32 %v976, %v1267
        %v1269 = vpop.f32.mrb[0].mxu0
        %1270 = vmatprep.mubr.f32.mxu0 0.0
        %1271 = vmatmul.mubr.f32.gmra.mrb[0].mxu0 %v1001
        %v1272 = vpop.f32.mrb[0].mxu0
        %v1273 = vadd.f32 %v976, %v1272
        %v1274 = vpop.f32.mrb[0].mxu0
        %1275 = vmatprep.mubr.f32.mxu0 0.0
        %1276 = vmatmul.mubr.f32.gmra.mrb[0].mxu0 %v1004
        %v1277 = vpop.f32.mrb[0].mxu0
        %v1278 = vadd.f32 %v976, %v1277
        %v1279 = vpop.f32.mrb[0].mxu0
        %1280 = vmatprep.mubr.f32.mxu0 0.0
        %1281 = vmatmul.mubr.f32.gmra.mrb[0].mxu0 %v1007
        %v1282 = vpop.f32.mrb[0].mxu0
        %v1283 = vadd.f32 %v976, %v1282
        %v1284 = vpop.f32.mrb[0].mxu0
        %1285 = vmatprep.mubr.f32.mxu0 0.0
        %1286 = vmatmul.mubr.f32.gmra.mrb[0].mxu0 %v1010
        %v1287 = vpop.f32.mrb[0].mxu0
        %v1288 = vadd.f32 %v976, %v1287
        %v1289 = vpop.f32.mrb[0].mxu0
        %1290 = vmatprep.mubr.f32.mxu0 0.0
        %1291 = vmatmul.mubr.f32.gmra.mrb[0].mxu0 %v1013
        %v1292 = vpop.f32.mrb[0].mxu0
        %v1293 = vadd.f32 %v976, %v1292
        %v1294 = vpop.f32.mrb[0].mxu0
        %1295 = vmatprep.mubr.f32.mxu0 0.0
        %1296 = vmatmul.mubr.f32.gmra.mrb[0].mxu0 %v1016
        %v1297 = vpop.f32.mrb[0].mxu0
        %v1298 = vadd.f32 %v976, %v1297
        %v1299 = vpop.f32.mrb[0].mxu0
        %1300 = vmatprep.mubr.f32.mxu0 0.0
        %1301 = vmatmul.mubr.f32.gmra.mrb[0].mxu0 %v1019
        %v1302 = vpop.f32.mrb[0].mxu0
        %v1303 = vadd.f32 %v976, %v1302
        %v1304 = vpop.f32.mrb[0].mxu0
        %1305 = vmatprep.mubr.f32.mxu0 0.0
        %1306 = vmatmul.mubr.f32.gmra.mrb[0].mxu0 %v1022
        %v1307 = vpop.f32.mrb[0].mxu0
        %v1308 = vadd.f32 %v976, %v1307
        %v1309 = vpop.f32.mrb[0].mxu0
        %1310 = vmatprep.mubr.f32.mxu0 0.0
        %1311 = vmatmul.mubr.f32.gmra.mrb[0].mxu0 %v1025
        %v1312 = vpop.f32.mrb[0].mxu0
        %v1313 = vadd.f32 %v976, %v1312
        %v1314 = vpop.f32.mrb[0].mxu0
        %1315 = vmatprep.mubr.f32.mxu0 0.0
        %1316 = vmatmul.mubr.f32.gmra.mrb[0].mxu0 %v1028
        %v1317 = vpop.f32.mrb[0].mxu0
        %v1318 = vadd.f32 %v976, %v1317
        %v1319 = vpop.f32.mrb[0].mxu0
        %1320 = vmatprep.mubr.f32.mxu0 0.0
        %1321 = vmatmul.mubr.f32.gmra.mrb[0].mxu0 %v1031
        %v1322 = vpop.f32.mrb[0].mxu0
        %v1323 = vadd.f32 %v976, %v1322
        %v1324 = vpop.f32.mrb[0].mxu0
        %1325 = vmatprep.mubr.f32.mxu0 0.0
        %1326 = vmatmul.mubr.f32.gmra.mrb[0].mxu0 %v1034
        %v1327 = vpop.f32.mrb[0].mxu0
        %v1328 = vadd.f32 %v976, %v1327
        %v1329 = vpop.f32.mrb[0].mxu0
        %1330 = vmatprep.mubr.f32.mxu0 0.0
        %1331 = vmatmul.mubr.f32.gmra.mrb[0].mxu0 %v1037
        %v1332 = vpop.f32.mrb[0].mxu0
        %v1333 = vadd.f32 %v976, %v1332
        %v1334 = vpop.f32.mrb[0].mxu0
        %1335 = vmatprep.mubr.f32.mxu0 0.0
        %1336 = vmatmul.mubr.f32.gmra.mrb[0].mxu0 %v1040
        %v1337 = vpop.f32.mrb[0].mxu0
        %v1338 = vadd.f32 %v976, %v1337
        %v1339 = vpop.f32.mrb[0].mxu0
        %1340 = vmatprep.mubr.f32.mxu0 0.0
        %1341 = vmatmul.mubr.f32.gmra.mrb[0].mxu0 %v1043
        %v1342 = vpop.f32.mrb[0].mxu0
        %v1343 = vadd.f32 %v976, %v1342
        %v1344 = vpop.f32.mrb[0].mxu0
        %1345 = vmatprep.mubr.f32.mxu0 0.0
        %1346 = vmatmul.mubr.f32.gmra.mrb[0].mxu0 %v1046
        %v1347 = vpop.f32.mrb[0].mxu0
        %v1348 = vadd.f32 %v976, %v1347
        %v1349 = vpop.f32.mrb[0].mxu0
        %1350 = vmatprep.mubr.f32.mxu0 0.0
        %1351 = vmatmul.mubr.f32.gmra.mrb[0].mxu0 %v1049
        %v1352 = vpop.f32.mrb[0].mxu0
        %v1353 = vadd.f32 %v976, %v1352
        %v1354 = vpop.f32.mrb[0].mxu0
        %1355 = vmatprep.mubr.f32.mxu0 0.0
        %1356 = vmatmul.mubr.f32.gmra.mrb[0].mxu0 %v1052
        %v1357 = vpop.f32.mrb[0].mxu0
        %v1358 = vadd.f32 %v976, %v1357
        %v1359 = vpop.f32.mrb[0].mxu0
        %1360 = vmatprep.mubr.f32.mxu0 0.0
        %1361 = vmatmul.mubr.f32.gmra.mrb[0].mxu0 %v1055
        %v1362 = vpop.f32.mrb[0].mxu0
        %v1363 = vadd.f32 %v976, %v1362
        %v1364 = vpop.f32.mrb[0].mxu0
        %1365 = vmatprep.mubr.f32.mxu0 0.0
        %1366 = vmatmul.mubr.f32.gmra.mrb[0].mxu0 %v1058
        %v1367 = vpop.f32.mrb[0].mxu0
        %v1368 = vadd.f32 %v976, %v1367
        %v1369 = vpop.f32.mrb[0].mxu0
        %1370 = vmatprep.mubr.f32.mxu0 0.0
        %1371 = vmatmul.mubr.f32.gmra.mrb[0].mxu0 %v1061
        %v1372 = vpop.f32.mrb[0].mxu0
        %v1373 = vadd.f32 %v976, %v1372
        %v1374 = vpop.f32.mrb[0].mxu0
        %1375 = vmatprep.mubr.f32.mxu0 0.0
        %1376 = vmatmul.mubr.f32.gmra.mrb[0].mxu0 %v1064
        %v1377 = vpop.f32.mrb[0].mxu0
        %v1378 = vadd.f32 %v976, %v1377
        %v1379 = vpop.f32.mrb[0].mxu0
        %1380 = vmatprep.mubr.f32.mxu0 0.0
        %1381 = vmatmul.mubr.f32.gmra.mrb[0].mxu0 %v1067
        %v1382 = vpop.f32.mrb[0].mxu0
        %v1383 = vadd.f32 %v976, %v1382
        %v1384 = vpop.f32.mrb[0].mxu0
        %1385 = vmatprep.mubr.f32.mxu0 0.0
        %1386 = vmatmul.mubr.f32.gmra.mrb[0].mxu0 %v1070
        %v1387 = vpop.f32.mrb[0].mxu0
        %v1388 = vadd.f32 %v976, %v1387
        %v1389 = vpop.f32.mrb[0].mxu0
        %1390 = vmatprep.mubr.f32.mxu0 0.0
        %1391 = vmatmul.mubr.f32.gmra.mrb[0].mxu0 %v1073
        %v1392 = vpop.f32.mrb[0].mxu0
        %v1393 = vadd.f32 %v976, %v1392
        %v1394 = vpop.f32.mrb[0].mxu0
        %1395 = vmatprep.mubr.f32.mxu0 0.0
        %1396 = vmatmul.mubr.f32.gmra.mrb[0].mxu0 %v1076
        %v1397 = vpop.f32.mrb[0].mxu0
        %v1398 = vadd.f32 %v976, %v1397
        %v1399 = vpop.f32.mrb[0].mxu0
        %1400 = vmatprep.mubr.f32.mxu0 0.0
        %1401 = vmatmul.mubr.f32.gmra.mrb[0].mxu0 %v1079
        %v1402 = vpop.f32.mrb[0].mxu0
        %v1403 = vadd.f32 %v976, %v1402
        %v1404 = vpop.f32.mrb[0].mxu0
        %1405 = vmatprep.mubr.f32.mxu0 0.0
        %1406 = vmatmul.mubr.f32.gmra.mrb[0].mxu0 %v1082
        %v1407 = vpop.f32.mrb[0].mxu0
        %v1408 = vadd.f32 %v976, %v1407
        %v1409 = vpop.f32.mrb[0].mxu0
        %1410 = vmatprep.mubr.f32.mxu0 0.0
        %1411 = vmatmul.mubr.f32.gmra.mrb[0].mxu0 %v1085
        %v1412 = vpop.f32.mrb[0].mxu0
        %v1413 = vadd.f32 %v976, %v1412
        %v1414 = vpop.f32.mrb[0].mxu0
        %1415 = vmatprep.mubr.f32.mxu0 0.0
        %1416 = vmatmul.mubr.f32.gmra.mrb[0].mxu0 %v1088
        %v1417 = vpop.f32.mrb[0].mxu0
        %v1418 = vadd.f32 %v976, %v1417
        %v1419 = vpop.f32.mrb[0].mxu0
        %1420 = vmatprep.mubr.f32.mxu0 0.0
        %1421 = vmatmul.mubr.f32.gmra.mrb[0].mxu0 %v1091
        %v1422 = vpop.f32.mrb[0].mxu0
        %v1423 = vadd.f32 %v976, %v1422
        %v1424 = vpop.f32.mrb[0].mxu0
        %1425 = vmatprep.mubr.f32.mxu0 0.0
        %1426 = vmatmul.mubr.f32.gmra.mrb[0].mxu0 %v1094
        %v1427 = vpop.f32.mrb[0].mxu0
        %v1428 = vadd.f32 %v976, %v1427
        %v1429 = vpop.f32.mrb[0].mxu0
        %1430 = vmatprep.mubr.f32.mxu0 0.0
        %1431 = vmatmul.mubr.f32.gmra.mrb[0].mxu0 %v1097
        %v1432 = vpop.f32.mrb[0].mxu0
        %v1433 = vadd.f32 %v976, %v1432
        %v1434 = vpop.f32.mrb[0].mxu0
        %1435 = vmatprep.mubr.f32.mxu0 0.0
        %1436 = vmatmul.mubr.f32.gmra.mrb[0].mxu0 %v1100
        %v1437 = vpop.f32.mrb[0].mxu0
        %v1438 = vadd.f32 %v976, %v1437
        %v1439 = vpop.f32.mrb[0].mxu0
        %1440 = vmatprep.mubr.f32.mxu0 0.0
        %1441 = vmatmul.mubr.f32.gmra.mrb[0].mxu0 %v1103
        %v1442 = vpop.f32.mrb[0].mxu0
        %v1443 = vadd.f32 %v976, %v1442
        %v1444 = vpop.f32.mrb[0].mxu0
        %1445 = vmatprep.mubr.f32.mxu0 0.0
        %1446 = vmatmul.mubr.f32.gmra.mrb[0].mxu0 %v1106
        %v1447 = vpop.f32.mrb[0].mxu0
        %v1448 = vadd.f32 %v976, %v1447
        %v1449 = vpop.f32.mrb[0].mxu0
        %1450 = vmatprep.mubr.f32.mxu0 0.0
        %1451 = vmatmul.mubr.f32.gmra.mrb[0].mxu0 %v1109
        %v1452 = vpop.f32.mrb[0].mxu0
        %v1453 = vadd.f32 %v976, %v1452
        %v1454 = vpop.f32.mrb[0].mxu0
        %1455 = vmatprep.mubr.f32.mxu0 0.0
        %1456 = vmatmul.mubr.f32.gmra.mrb[0].mxu0 %v1112
        %v1457 = vpop.f32.mrb[0].mxu0
        %v1458 = vadd.f32 %v976, %v1457
        %v1459 = vpop.f32.mrb[0].mxu0
        %1460 = vmatprep.mubr.f32.mxu0 0.0
        %1461 = vmatmul.mubr.f32.gmra.mrb[0].mxu0 %v1115
        %v1462 = vpop.f32.mrb[0].mxu0
        %v1463 = vadd.f32 %v976, %v1462
        %v1464 = vpop.f32.mrb[0].mxu0
        %1465 = vmatprep.mubr.f32.mxu0 0.0
        %1466 = vmatmul.mubr.f32.gmra.mrb[0].mxu0 %v1118
        %v1467 = vpop.f32.mrb[0].mxu0
        %v1468 = vadd.f32 %v976, %v1467
        %v1469 = vpop.f32.mrb[0].mxu0
        %1470 = vmatprep.mubr.f32.mxu0 0.0
        %1471 = vmatmul.mubr.f32.gmra.mrb[0].mxu0 %v1121
        %v1472 = vpop.f32.mrb[0].mxu0
        %v1473 = vadd.f32 %v976, %v1472
        %v1474 = vpop.f32.mrb[0].mxu0
        %1475 = vmatprep.mubr.f32.mxu0 0.0
        %1476 = vmatmul.mubr.f32.gmra.mrb[0].mxu0 %v1124
        %v1477 = vpop.f32.mrb[0].mxu0
        %v1478 = vadd.f32 %v976, %v1477
        %v1479 = vpop.f32.mrb[0].mxu0
        %1480 = vmatprep.mubr.f32.mxu0 0.0
        %1481 = vmatmul.mubr.f32.gmra.mrb[0].mxu0 %v1127
        %v1482 = vpop.f32.mrb[0].mxu0
        %v1483 = vadd.f32 %v976, %v1482
        %v1484 = vpop.f32.mrb[0].mxu0
        %1485 = vmatprep.mubr.f32.mxu0 0.0
        %1486 = vmatmul.mubr.f32.gmra.mrb[0].mxu0 %v1130
        %v1487 = vpop.f32.mrb[0].mxu0
        %v1488 = vadd.f32 %v976, %v1487
        %v1489 = vpop.f32.mrb[0].mxu0
        %1490 = vmatprep.mubr.f32.mxu0 0.0
        %1491 = vmatmul.mubr.f32.gmra.mrb[0].mxu0 %v1133
        %v1492 = vpop.f32.mrb[0].mxu0
        %v1493 = vadd.f32 %v976, %v1492
        %v1494 = vpop.f32.mrb[0].mxu0
        %1495 = vmatprep.mubr.f32.mxu0 0.0
        %1496 = vmatmul.mubr.f32.gmra.mrb[0].mxu0 %v1136
        %v1497 = vpop.f32.mrb[0].mxu0
        %v1498 = vadd.f32 %v976, %v1497
        %v1499 = vpop.f32.mrb[0].mxu0
        %1500 = vmatprep.mubr.f32.mxu0 0.0
        %1501 = vmatmul.mubr.f32.gmra.mrb[0].mxu0 %v1139
        %v1502 = vpop.f32.mrb[0].mxu0
        %v1503 = vadd.f32 %v976, %v1502
        %v1504 = vpop.f32.mrb[0].mxu0
        %1505 = vmatprep.mubr.f32.mxu0 0.0
        %1506 = vmatmul.mubr.f32.gmra.mrb[0].mxu0 %v1142
        %v1507 = vpop.f32.mrb[0].mxu0
        %v1508 = vadd.f32 %v976, %v1507
        %v1509 = vpop.f32.mrb[0].mxu0
        %1510 = vmatprep.mubr.f32.mxu0 0.0
        %1511 = vmatmul.mubr.f32.gmra.mrb[0].mxu0 %v1145
        %v1512 = vpop.f32.mrb[0].mxu0
        %v1513 = vadd.f32 %v976, %v1512
        %v1514 = vpop.f32.mrb[0].mxu0
        %1515 = vmatprep.mubr.f32.mxu0 0.0
        %1516 = vmatmul.mubr.f32.gmra.mrb[0].mxu0 %v1148
        %v1517 = vpop.f32.mrb[0].mxu0
        %v1518 = vadd.f32 %v976, %v1517
        %v1519 = vpop.f32.mrb[0].mxu0
        %1520 = vmatprep.mubr.f32.mxu0 0.0
        %1521 = vmatmul.mubr.f32.gmra.mrb[0].mxu0 %v1151
        %v1522 = vpop.f32.mrb[0].mxu0
        %v1523 = vadd.f32 %v976, %v1522
        %v1524 = vpop.f32.mrb[0].mxu0
        %1525 = vmatprep.mubr.f32.mxu0 0.0
        %1526 = vmatmul.mubr.f32.gmra.mrb[0].mxu0 %v1154
        %v1527 = vpop.f32.mrb[0].mxu0
        %v1528 = vadd.f32 %v976, %v1527
        %v1529 = vpop.f32.mrb[0].mxu0
        %1530 = vmatprep.mubr.f32.mxu0 0.0
        %1531 = vmatmul.mubr.f32.gmra.mrb[0].mxu0 %v1157
        %v1532 = vpop.f32.mrb[0].mxu0
        %v1533 = vadd.f32 %v976, %v1532
        %v1534 = vpop.f32.mrb[0].mxu0
        %1535 = vmatprep.mubr.f32.mxu0 0.0
        %1536 = vmatmul.mubr.f32.gmra.mrb[0].mxu0 %v1160
        %v1537 = vpop.f32.mrb[0].mxu0
        %v1538 = vadd.f32 %v976, %v1537
        %v1539 = vpop.f32.mrb[0].mxu0
        %1540 = vmatprep.mubr.f32.mxu0 0.0
        %1541 = vmatmul.mubr.f32.gmra.mrb[0].mxu0 %v1163
        %v1542 = vpop.f32.mrb[0].mxu0
        %v1543 = vadd.f32 %v976, %v1542
        %v1544 = vpop.f32.mrb[0].mxu0
        %1545 = vmatprep.mubr.f32.mxu0 0.0
        %1546 = vmatmul.mubr.f32.gmra.mrb[0].mxu0 %v1166
        %v1547 = vpop.f32.mrb[0].mxu0
        %v1548 = vadd.f32 %v976, %v1547
        %v1549 = vpop.f32.mrb[0].mxu0
        %1550 = vmatprep.mubr.f32.mxu0 0.0
        %1551 = vmatmul.mubr.f32.gmra.mrb[0].mxu0 %v1169
        %v1552 = vpop.f32.mrb[0].mxu0
        %v1553 = vadd.f32 %v976, %v1552
        %v1554 = vpop.f32.mrb[0].mxu0
        %1555 = vdwg.mxu0
        %vm1556 = vcmask 31744
        %1557 = vst.msk [vmem:[%s226] sm:$0xff] %vm1556, %v1238
        %1558 = vst.msk [vmem:[%s226 + $0x8] sm:$0xff] %vm1556, %v1243
        %1559 = vst.msk [vmem:[%s226 + $0x10] sm:$0xff] %vm1556, %v1248
        %1560 = vst.msk [vmem:[%s226 + $0x18] sm:$0xff] %vm1556, %v1253
        %1561 = vst.msk [vmem:[%s226 + $0x20] sm:$0xff] %vm1556, %v1258
        %1562 = vst.msk [vmem:[%s226 + $0x28] sm:$0xff] %vm1556, %v1263
        %1563 = vst.msk [vmem:[%s226 + $0x30] sm:$0xff] %vm1556, %v1268
        %1564 = vst.msk [vmem:[%s226 + $0x38] sm:$0xff] %vm1556, %v1273
        %1565 = vst.msk [vmem:[%s226 + $0x40] sm:$0xff] %vm1556, %v1278
        %1566 = vst.msk [vmem:[%s226 + $0x48] sm:$0xff] %vm1556, %v1283
        %1567 = vst.msk [vmem:[%s226 + $0x50] sm:$0xff] %vm1556, %v1288
        %1568 = vst.msk [vmem:[%s226 + $0x58] sm:$0xff] %vm1556, %v1293
        %1569 = vst.msk [vmem:[%s226 + $0x60] sm:$0xff] %vm1556, %v1298
        %1570 = vst.msk [vmem:[%s226 + $0x68] sm:$0xff] %vm1556, %v1303
        %1571 = vst.msk [vmem:[%s226 + $0x70] sm:$0xff] %vm1556, %v1308
        %1572 = vst.msk [vmem:[%s226 + $0x78] sm:$0xff] %vm1556, %v1313
        %1573 = vst.msk [vmem:[%s226 + $0x80] sm:$0xff] %vm1556, %v1318
        %1574 = vst.msk [vmem:[%s226 + $0x88] sm:$0xff] %vm1556, %v1323
        %1575 = vst.msk [vmem:[%s226 + $0x90] sm:$0xff] %vm1556, %v1328
        %1576 = vst.msk [vmem:[%s226 + $0x98] sm:$0xff] %vm1556, %v1333
        %1577 = vst.msk [vmem:[%s226 + $0xa0] sm:$0xff] %vm1556, %v1338
        %1578 = vst.msk [vmem:[%s226 + $0xa8] sm:$0xff] %vm1556, %v1343
        %1579 = vst.msk [vmem:[%s226 + $0xb0] sm:$0xff] %vm1556, %v1348
        %1580 = vst.msk [vmem:[%s226 + $0xb8] sm:$0xff] %vm1556, %v1353
        %1581 = vst.msk [vmem:[%s226 + $0xc0] sm:$0xff] %vm1556, %v1358
        %1582 = vst.msk [vmem:[%s226 + $0xc8] sm:$0xff] %vm1556, %v1363
        %1583 = vst.msk [vmem:[%s226 + $0xd0] sm:$0xff] %vm1556, %v1368
        %1584 = vst.msk [vmem:[%s226 + $0xd8] sm:$0xff] %vm1556, %v1373
        %1585 = vst.msk [vmem:[%s226 + $0xe0] sm:$0xff] %vm1556, %v1378
        %1586 = vst.msk [vmem:[%s226 + $0xe8] sm:$0xff] %vm1556, %v1383
        %1587 = vst.msk [vmem:[%s226 + $0xf0] sm:$0xff] %vm1556, %v1388
        %1588 = vst.msk [vmem:[%s226 + $0xf8] sm:$0xff] %vm1556, %v1393
        %1589 = vst.msk [vmem:[%s226 + $0x100] sm:$0xff] %vm1556, %v1398
        %1590 = vst.msk [vmem:[%s226 + $0x108] sm:$0xff] %vm1556, %v1403
        %1591 = vst.msk [vmem:[%s226 + $0x110] sm:$0xff] %vm1556, %v1408
        %1592 = vst.msk [vmem:[%s226 + $0x118] sm:$0xff] %vm1556, %v1413
        %1593 = vst.msk [vmem:[%s226 + $0x120] sm:$0xff] %vm1556, %v1418
        %1594 = vst.msk [vmem:[%s226 + $0x128] sm:$0xff] %vm1556, %v1423
        %1595 = vst.msk [vmem:[%s226 + $0x130] sm:$0xff] %vm1556, %v1428
        %1596 = vst.msk [vmem:[%s226 + $0x138] sm:$0xff] %vm1556, %v1433
        %1597 = vst.msk [vmem:[%s226 + $0x140] sm:$0xff] %vm1556, %v1438
        %1598 = vst.msk [vmem:[%s226 + $0x148] sm:$0xff] %vm1556, %v1443
        %1599 = vst.msk [vmem:[%s226 + $0x150] sm:$0xff] %vm1556, %v1448
        %1600 = vst.msk [vmem:[%s226 + $0x158] sm:$0xff] %vm1556, %v1453
        %1601 = vst.msk [vmem:[%s226 + $0x160] sm:$0xff] %vm1556, %v1458
        %1602 = vst.msk [vmem:[%s226 + $0x168] sm:$0xff] %vm1556, %v1463
        %1603 = vst.msk [vmem:[%s226 + $0x170] sm:$0xff] %vm1556, %v1468
        %1604 = vst.msk [vmem:[%s226 + $0x178] sm:$0xff] %vm1556, %v1473
        %1605 = vst.msk [vmem:[%s226 + $0x180] sm:$0xff] %vm1556, %v1478
        %1606 = vst.msk [vmem:[%s226 + $0x188] sm:$0xff] %vm1556, %v1483
        %1607 = vst.msk [vmem:[%s226 + $0x190] sm:$0xff] %vm1556, %v1488
        %1608 = vst.msk [vmem:[%s226 + $0x198] sm:$0xff] %vm1556, %v1493
        %1609 = vst.msk [vmem:[%s226 + $0x1a0] sm:$0xff] %vm1556, %v1498
        %1610 = vst.msk [vmem:[%s226 + $0x1a8] sm:$0xff] %vm1556, %v1503
        %1611 = vst.msk [vmem:[%s226 + $0x1b0] sm:$0xff] %vm1556, %v1508
        %1612 = vst.msk [vmem:[%s226 + $0x1b8] sm:$0xff] %vm1556, %v1513
        %1613 = vst.msk [vmem:[%s226 + $0x1c0] sm:$0xff] %vm1556, %v1518
        %1614 = vst.msk [vmem:[%s226 + $0x1c8] sm:$0xff] %vm1556, %v1523
        %1615 = vst.msk [vmem:[%s226 + $0x1d0] sm:$0xff] %vm1556, %v1528
        %1616 = vst.msk [vmem:[%s226 + $0x1d8] sm:$0xff] %vm1556, %v1533
        %1617 = vst.msk [vmem:[%s226 + $0x1e0] sm:$0xff] %vm1556, %v1538
        %1618 = vst.msk [vmem:[%s226 + $0x1e8] sm:$0xff] %vm1556, %v1543
        %1619 = vst.msk [vmem:[%s226 + $0x1f0] sm:$0xff] %vm1556, %v1548
        %1620 = vst.msk [vmem:[%s226 + $0x1f8] sm:$0xff] %vm1556, %v1553
        %s1621 = sand.u32 %s134, 1
        %s1622 = sand.u32 %s134, 1
        %s1623 = smul.addr %s1622, 512
        %s1624 = scalar_lea.vmem [#allocation2], %s1623
        // Predicated region
        $region41: #{tpu_custom_call.1} parent=39 // pred_check
          %p1625 = pneg %p144
        $region42: #{tpu_custom_call.1} parent=39 // pred_check_branch
          %1627 = sbr.rel (%p1625) target = $region44
        $region43: #{tpu_custom_call.1} parent=39 // pred_region
          %s1628 = smul.u32 64, %s16
          %s1629 = ssub.s32 129, %s1628
          %p1630 = scmp.lt.s32.totalorder %s1629, 64
          %s1631 = scalar_select %p1630, %s1629, 64
          %s1632 = smul.u32 128, %s1631
          %p1633 = scmp.ne.s32.totalorder 0, %s1632
          %s1634 = smul.addr %s1628, 8
          %s1635 = scalar_lea.vmem %s5, %s1634
          // Predicated region
          $region45: #{tpu_custom_call.1} parent=43 // pred_check
            %p1636 = pneg %p1633
          $region46: #{tpu_custom_call.1} parent=43 // pred_check_branch
            %1638 = sbr.rel (%p1636) target = $region48
          $region47: #{tpu_custom_call.1} parent=43 // pred_region
            // Predicated region
            $region49: #{tpu_custom_call.1} parent=47 // pred_check
              _
            $region50: #{tpu_custom_call.1} parent=47 // pred_check_branch
              %1640 = sbr.rel (0) target = $region52
            $region51: #{tpu_custom_call.1} parent=47 // pred_region
              // Predicated region
              $region71: #{tpu_custom_call.1} parent=51 // pred_check
                _
              $region72: #{tpu_custom_call.1} parent=51 // pred_check_branch
                %1815 = sbr.rel (0) target = $region74
              $region73: #{tpu_custom_call.1} parent=51 // pred_region
                %s1816 = sshrl.u32 %s1631, 6
                // While loop
                $region75: #{tpu_custom_call.1} parent=73 // loop_pre_header
                  _
                $region76: #{tpu_custom_call.1} parent=73 // loop_header
                  %s1818 = sphi 0, %s1820
                  %p1819 = scmp.ge.s32.totalorder %s1818, %s1816
                  %s1823 = sphi 0, %s1956
                  %s1824 = sphi %s1624, %s1959
                  %s1825 = sphi %s1635, %s1960
                $region77: #{tpu_custom_call.1} parent=73 // loop_header_branch
                  %1822 = sbr.rel (%p1819) target = $region81
                $region78: #{tpu_custom_call.1} parent=73 // loop_body
                  %v1826 = vld [vmem:[%s1824] sm:$0xff]
                  %1827 = vst [vmem:[%s1825] sm:$0xff] %v1826
                  %v1828 = vld [vmem:[%s1824 + $0x8] sm:$0xff]
                  %1829 = vst [vmem:[%s1825 + $0x8] sm:$0xff] %v1828
                  %v1830 = vld [vmem:[%s1824 + $0x10] sm:$0xff]
                  %1831 = vst [vmem:[%s1825 + $0x10] sm:$0xff] %v1830
                  %v1832 = vld [vmem:[%s1824 + $0x18] sm:$0xff]
                  %1833 = vst [vmem:[%s1825 + $0x18] sm:$0xff] %v1832
                  %v1834 = vld [vmem:[%s1824 + $0x20] sm:$0xff]
                  %1835 = vst [vmem:[%s1825 + $0x20] sm:$0xff] %v1834
                  %v1836 = vld [vmem:[%s1824 + $0x28] sm:$0xff]
                  %1837 = vst [vmem:[%s1825 + $0x28] sm:$0xff] %v1836
                  %v1838 = vld [vmem:[%s1824 + $0x30] sm:$0xff]
                  %1839 = vst [vmem:[%s1825 + $0x30] sm:$0xff] %v1838
                  %v1840 = vld [vmem:[%s1824 + $0x38] sm:$0xff]
                  %1841 = vst [vmem:[%s1825 + $0x38] sm:$0xff] %v1840
                  %v1842 = vld [vmem:[%s1824 + $0x40] sm:$0xff]
                  %1843 = vst [vmem:[%s1825 + $0x40] sm:$0xff] %v1842
                  %v1844 = vld [vmem:[%s1824 + $0x48] sm:$0xff]
                  %1845 = vst [vmem:[%s1825 + $0x48] sm:$0xff] %v1844
                  %v1846 = vld [vmem:[%s1824 + $0x50] sm:$0xff]
                  %1847 = vst [vmem:[%s1825 + $0x50] sm:$0xff] %v1846
                  %v1848 = vld [vmem:[%s1824 + $0x58] sm:$0xff]
                  %1849 = vst [vmem:[%s1825 + $0x58] sm:$0xff] %v1848
                  %v1850 = vld [vmem:[%s1824 + $0x60] sm:$0xff]
                  %1851 = vst [vmem:[%s1825 + $0x60] sm:$0xff] %v1850
                  %v1852 = vld [vmem:[%s1824 + $0x68] sm:$0xff]
                  %1853 = vst [vmem:[%s1825 + $0x68] sm:$0xff] %v1852
                  %v1854 = vld [vmem:[%s1824 + $0x70] sm:$0xff]
                  %1855 = vst [vmem:[%s1825 + $0x70] sm:$0xff] %v1854
                  %v1856 = vld [vmem:[%s1824 + $0x78] sm:$0xff]
                  %1857 = vst [vmem:[%s1825 + $0x78] sm:$0xff] %v1856
                  %v1858 = vld [vmem:[%s1824 + $0x80] sm:$0xff]
                  %1859 = vst [vmem:[%s1825 + $0x80] sm:$0xff] %v1858
                  %v1860 = vld [vmem:[%s1824 + $0x88] sm:$0xff]
                  %1861 = vst [vmem:[%s1825 + $0x88] sm:$0xff] %v1860
                  %v1862 = vld [vmem:[%s1824 + $0x90] sm:$0xff]
                  %1863 = vst [vmem:[%s1825 + $0x90] sm:$0xff] %v1862
                  %v1864 = vld [vmem:[%s1824 + $0x98] sm:$0xff]
                  %1865 = vst [vmem:[%s1825 + $0x98] sm:$0xff] %v1864
                  %v1866 = vld [vmem:[%s1824 + $0xa0] sm:$0xff]
                  %1867 = vst [vmem:[%s1825 + $0xa0] sm:$0xff] %v1866
                  %v1868 = vld [vmem:[%s1824 + $0xa8] sm:$0xff]
                  %1869 = vst [vmem:[%s1825 + $0xa8] sm:$0xff] %v1868
                  %v1870 = vld [vmem:[%s1824 + $0xb0] sm:$0xff]
                  %1871 = vst [vmem:[%s1825 + $0xb0] sm:$0xff] %v1870
                  %v1872 = vld [vmem:[%s1824 + $0xb8] sm:$0xff]
                  %1873 = vst [vmem:[%s1825 + $0xb8] sm:$0xff] %v1872
                  %v1874 = vld [vmem:[%s1824 + $0xc0] sm:$0xff]
                  %1875 = vst [vmem:[%s1825 + $0xc0] sm:$0xff] %v1874
                  %v1876 = vld [vmem:[%s1824 + $0xc8] sm:$0xff]
                  %1877 = vst [vmem:[%s1825 + $0xc8] sm:$0xff] %v1876
                  %v1878 = vld [vmem:[%s1824 + $0xd0] sm:$0xff]
                  %1879 = vst [vmem:[%s1825 + $0xd0] sm:$0xff] %v1878
                  %v1880 = vld [vmem:[%s1824 + $0xd8] sm:$0xff]
                  %1881 = vst [vmem:[%s1825 + $0xd8] sm:$0xff] %v1880
                  %v1882 = vld [vmem:[%s1824 + $0xe0] sm:$0xff]
                  %1883 = vst [vmem:[%s1825 + $0xe0] sm:$0xff] %v1882
                  %v1884 = vld [vmem:[%s1824 + $0xe8] sm:$0xff]
                  %1885 = vst [vmem:[%s1825 + $0xe8] sm:$0xff] %v1884
                  %v1886 = vld [vmem:[%s1824 + $0xf0] sm:$0xff]
                  %1887 = vst [vmem:[%s1825 + $0xf0] sm:$0xff] %v1886
                  %v1888 = vld [vmem:[%s1824 + $0xf8] sm:$0xff]
                  %1889 = vst [vmem:[%s1825 + $0xf8] sm:$0xff] %v1888
                  %v1890 = vld [vmem:[%s1824 + $0x100] sm:$0xff]
                  %1891 = vst [vmem:[%s1825 + $0x100] sm:$0xff] %v1890
                  %v1892 = vld [vmem:[%s1824 + $0x108] sm:$0xff]
                  %1893 = vst [vmem:[%s1825 + $0x108] sm:$0xff] %v1892
                  %v1894 = vld [vmem:[%s1824 + $0x110] sm:$0xff]
                  %1895 = vst [vmem:[%s1825 + $0x110] sm:$0xff] %v1894
                  %v1896 = vld [vmem:[%s1824 + $0x118] sm:$0xff]
                  %1897 = vst [vmem:[%s1825 + $0x118] sm:$0xff] %v1896
                  %v1898 = vld [vmem:[%s1824 + $0x120] sm:$0xff]
                  %1899 = vst [vmem:[%s1825 + $0x120] sm:$0xff] %v1898
                  %v1900 = vld [vmem:[%s1824 + $0x128] sm:$0xff]
                  %1901 = vst [vmem:[%s1825 + $0x128] sm:$0xff] %v1900
                  %v1902 = vld [vmem:[%s1824 + $0x130] sm:$0xff]
                  %1903 = vst [vmem:[%s1825 + $0x130] sm:$0xff] %v1902
                  %v1904 = vld [vmem:[%s1824 + $0x138] sm:$0xff]
                  %1905 = vst [vmem:[%s1825 + $0x138] sm:$0xff] %v1904
                  %v1906 = vld [vmem:[%s1824 + $0x140] sm:$0xff]
                  %1907 = vst [vmem:[%s1825 + $0x140] sm:$0xff] %v1906
                  %v1908 = vld [vmem:[%s1824 + $0x148] sm:$0xff]
                  %1909 = vst [vmem:[%s1825 + $0x148] sm:$0xff] %v1908
                  %v1910 = vld [vmem:[%s1824 + $0x150] sm:$0xff]
                  %1911 = vst [vmem:[%s1825 + $0x150] sm:$0xff] %v1910
                  %v1912 = vld [vmem:[%s1824 + $0x158] sm:$0xff]
                  %1913 = vst [vmem:[%s1825 + $0x158] sm:$0xff] %v1912
                  %v1914 = vld [vmem:[%s1824 + $0x160] sm:$0xff]
                  %1915 = vst [vmem:[%s1825 + $0x160] sm:$0xff] %v1914
                  %v1916 = vld [vmem:[%s1824 + $0x168] sm:$0xff]
                  %1917 = vst [vmem:[%s1825 + $0x168] sm:$0xff] %v1916
                  %v1918 = vld [vmem:[%s1824 + $0x170] sm:$0xff]
                  %1919 = vst [vmem:[%s1825 + $0x170] sm:$0xff] %v1918
                  %v1920 = vld [vmem:[%s1824 + $0x178] sm:$0xff]
                  %1921 = vst [vmem:[%s1825 + $0x178] sm:$0xff] %v1920
                  %v1922 = vld [vmem:[%s1824 + $0x180] sm:$0xff]
                  %1923 = vst [vmem:[%s1825 + $0x180] sm:$0xff] %v1922
                  %v1924 = vld [vmem:[%s1824 + $0x188] sm:$0xff]
                  %1925 = vst [vmem:[%s1825 + $0x188] sm:$0xff] %v1924
                  %v1926 = vld [vmem:[%s1824 + $0x190] sm:$0xff]
                  %1927 = vst [vmem:[%s1825 + $0x190] sm:$0xff] %v1926
                  %v1928 = vld [vmem:[%s1824 + $0x198] sm:$0xff]
                  %1929 = vst [vmem:[%s1825 + $0x198] sm:$0xff] %v1928
                  %v1930 = vld [vmem:[%s1824 + $0x1a0] sm:$0xff]
                  %1931 = vst [vmem:[%s1825 + $0x1a0] sm:$0xff] %v1930
                  %v1932 = vld [vmem:[%s1824 + $0x1a8] sm:$0xff]
                  %1933 = vst [vmem:[%s1825 + $0x1a8] sm:$0xff] %v1932
                  %v1934 = vld [vmem:[%s1824 + $0x1b0] sm:$0xff]
                  %1935 = vst [vmem:[%s1825 + $0x1b0] sm:$0xff] %v1934
                  %v1936 = vld [vmem:[%s1824 + $0x1b8] sm:$0xff]
                  %1937 = vst [vmem:[%s1825 + $0x1b8] sm:$0xff] %v1936
                  %v1938 = vld [vmem:[%s1824 + $0x1c0] sm:$0xff]
                  %1939 = vst [vmem:[%s1825 + $0x1c0] sm:$0xff] %v1938
                  %v1940 = vld [vmem:[%s1824 + $0x1c8] sm:$0xff]
                  %1941 = vst [vmem:[%s1825 + $0x1c8] sm:$0xff] %v1940
                  %v1942 = vld [vmem:[%s1824 + $0x1d0] sm:$0xff]
                  %1943 = vst [vmem:[%s1825 + $0x1d0] sm:$0xff] %v1942
                  %v1944 = vld [vmem:[%s1824 + $0x1d8] sm:$0xff]
                  %1945 = vst [vmem:[%s1825 + $0x1d8] sm:$0xff] %v1944
                  %v1946 = vld [vmem:[%s1824 + $0x1e0] sm:$0xff]
                  %1947 = vst [vmem:[%s1825 + $0x1e0] sm:$0xff] %v1946
                  %v1948 = vld [vmem:[%s1824 + $0x1e8] sm:$0xff]
                  %1949 = vst [vmem:[%s1825 + $0x1e8] sm:$0xff] %v1948
                  %v1950 = vld [vmem:[%s1824 + $0x1f0] sm:$0xff]
                  %1951 = vst [vmem:[%s1825 + $0x1f0] sm:$0xff] %v1950
                  %v1952 = vld [vmem:[%s1824 + $0x1f8] sm:$0xff]
                  %1953 = vst [vmem:[%s1825 + $0x1f8] sm:$0xff] %v1952
                  %s1954 = sadd.s32 1, %s1823
                  %p1955 = scmp.ge.s32.totalorder %s1954, %s1816
                  %s1956 = scalar_select %p1955, 0, %s1954
                  %s1957 = smul.u32 %s1956, 512
                  %s1958 = smul.u32 %s1956, 512
                  %s1959 = scalar_lea.vmem %s1624, %s1957 [#allocation2]
                  %s1960 = scalar_lea.vmem %s1635, %s1958
                $region79: #{tpu_custom_call.1} parent=73 // loop_footer
                  %s1820 = sadd.s32 %s1818, 1
                $region80: #{tpu_custom_call.1} parent=73 // loop_footer_branch
                  %1817 = sbr.rel target = $region76
                $region81: #{tpu_custom_call.1} parent=73 // loop_exit
                  _
                %s1961 = sshrl.u32 %s1631, 6
                %s1962 = sand.u32 %s1631, 63
                %s1963 = smul.u32 %s1961, 64
                %s1964 = smul.u32 8, %s1963
                %s1965 = scalar_lea.vmem %s1624, %s1964 [#allocation2]
                %s1966 = smul.u32 8, %s1963
                %s1967 = scalar_lea.vmem %s1635, %s1966
                // While loop
                $region82: #{tpu_custom_call.1} parent=73 // loop_pre_header
                  _
                $region83: #{tpu_custom_call.1} parent=73 // loop_header
                  %s1969 = sphi 0, %s1971
                  %p1970 = scmp.ge.s32.totalorder %s1969, %s1962
                  %s1974 = sphi 0, %s1981
                  %s1975 = sphi %s1965, %s1984
                  %s1976 = sphi %s1967, %s1985
                $region84: #{tpu_custom_call.1} parent=73 // loop_header_branch
                  %1973 = sbr.rel (%p1970) target = $region88
                $region85: #{tpu_custom_call.1} parent=73 // loop_body
                  %v1977 = vld [vmem:[%s1975] sm:$0xff]
                  %1978 = vst [vmem:[%s1976] sm:$0xff] %v1977
                  %s1979 = sadd.s32 1, %s1974
                  %p1980 = scmp.ge.s32.totalorder %s1979, %s1962
                  %s1981 = scalar_select %p1980, 0, %s1979
                  %s1982 = smul.u32 %s1981, 8
                  %s1983 = smul.u32 %s1981, 8
                  %s1984 = scalar_lea.vmem %s1965, %s1982 [#allocation2]
                  %s1985 = scalar_lea.vmem %s1967, %s1983
                $region86: #{tpu_custom_call.1} parent=73 // loop_footer
                  %s1971 = sadd.s32 %s1969, 1
                $region87: #{tpu_custom_call.1} parent=73 // loop_footer_branch
                  %1968 = sbr.rel target = $region83
                $region88: #{tpu_custom_call.1} parent=73 // loop_exit
                  _
              $region74: #{tpu_custom_call.1} parent=51 // pred_fallthru
                _
              // Predicated region
              $region89: #{tpu_custom_call.1} parent=51 // pred_check
                _
              $region90: #{tpu_custom_call.1} parent=51 // pred_check_branch
                %1987 = sbr.rel target = $region92
              $region91: #{tpu_custom_call.1} parent=51 // pred_region
                _
              $region92: #{tpu_custom_call.1} parent=51 // pred_fallthru
                _
            $region52: #{tpu_custom_call.1} parent=47 // pred_fallthru
              _
            // Predicated region
            $region53: #{tpu_custom_call.1} parent=47 // pred_check
              _
            $region54: #{tpu_custom_call.1} parent=47 // pred_check_branch
              %1642 = sbr.rel target = $region56
            $region55: #{tpu_custom_call.1} parent=47 // pred_region
              %s1644 = sshrl.u32 %s1631, 6
              // While loop
              $region57: #{tpu_custom_call.1} parent=55 // loop_pre_header
                _
              $region58: #{tpu_custom_call.1} parent=55 // loop_header
                %s1646 = sphi 0, %s1648
                %p1647 = scmp.ge.s32.totalorder %s1646, %s1644
                %s1651 = sphi 0, %s1784
                %s1652 = sphi %s1624, %s1787
                %s1653 = sphi %s1635, %s1788
              $region59: #{tpu_custom_call.1} parent=55 // loop_header_branch
                %1650 = sbr.rel (%p1647) target = $region63
              $region60: #{tpu_custom_call.1} parent=55 // loop_body
                %v1654 = vld [vmem:[%s1652] sm:$0xff]
                %1655 = vst [vmem:[%s1653] sm:$0xff] %v1654
                %v1656 = vld [vmem:[%s1652 + $0x8] sm:$0xff]
                %1657 = vst [vmem:[%s1653 + $0x8] sm:$0xff] %v1656
                %v1658 = vld [vmem:[%s1652 + $0x10] sm:$0xff]
                %1659 = vst [vmem:[%s1653 + $0x10] sm:$0xff] %v1658
                %v1660 = vld [vmem:[%s1652 + $0x18] sm:$0xff]
                %1661 = vst [vmem:[%s1653 + $0x18] sm:$0xff] %v1660
                %v1662 = vld [vmem:[%s1652 + $0x20] sm:$0xff]
                %1663 = vst [vmem:[%s1653 + $0x20] sm:$0xff] %v1662
                %v1664 = vld [vmem:[%s1652 + $0x28] sm:$0xff]
                %1665 = vst [vmem:[%s1653 + $0x28] sm:$0xff] %v1664
                %v1666 = vld [vmem:[%s1652 + $0x30] sm:$0xff]
                %1667 = vst [vmem:[%s1653 + $0x30] sm:$0xff] %v1666
                %v1668 = vld [vmem:[%s1652 + $0x38] sm:$0xff]
                %1669 = vst [vmem:[%s1653 + $0x38] sm:$0xff] %v1668
                %v1670 = vld [vmem:[%s1652 + $0x40] sm:$0xff]
                %1671 = vst [vmem:[%s1653 + $0x40] sm:$0xff] %v1670
                %v1672 = vld [vmem:[%s1652 + $0x48] sm:$0xff]
                %1673 = vst [vmem:[%s1653 + $0x48] sm:$0xff] %v1672
                %v1674 = vld [vmem:[%s1652 + $0x50] sm:$0xff]
                %1675 = vst [vmem:[%s1653 + $0x50] sm:$0xff] %v1674
                %v1676 = vld [vmem:[%s1652 + $0x58] sm:$0xff]
                %1677 = vst [vmem:[%s1653 + $0x58] sm:$0xff] %v1676
                %v1678 = vld [vmem:[%s1652 + $0x60] sm:$0xff]
                %1679 = vst [vmem:[%s1653 + $0x60] sm:$0xff] %v1678
                %v1680 = vld [vmem:[%s1652 + $0x68] sm:$0xff]
                %1681 = vst [vmem:[%s1653 + $0x68] sm:$0xff] %v1680
                %v1682 = vld [vmem:[%s1652 + $0x70] sm:$0xff]
                %1683 = vst [vmem:[%s1653 + $0x70] sm:$0xff] %v1682
                %v1684 = vld [vmem:[%s1652 + $0x78] sm:$0xff]
                %1685 = vst [vmem:[%s1653 + $0x78] sm:$0xff] %v1684
                %v1686 = vld [vmem:[%s1652 + $0x80] sm:$0xff]
                %1687 = vst [vmem:[%s1653 + $0x80] sm:$0xff] %v1686
                %v1688 = vld [vmem:[%s1652 + $0x88] sm:$0xff]
                %1689 = vst [vmem:[%s1653 + $0x88] sm:$0xff] %v1688
                %v1690 = vld [vmem:[%s1652 + $0x90] sm:$0xff]
                %1691 = vst [vmem:[%s1653 + $0x90] sm:$0xff] %v1690
                %v1692 = vld [vmem:[%s1652 + $0x98] sm:$0xff]
                %1693 = vst [vmem:[%s1653 + $0x98] sm:$0xff] %v1692
                %v1694 = vld [vmem:[%s1652 + $0xa0] sm:$0xff]
                %1695 = vst [vmem:[%s1653 + $0xa0] sm:$0xff] %v1694
                %v1696 = vld [vmem:[%s1652 + $0xa8] sm:$0xff]
                %1697 = vst [vmem:[%s1653 + $0xa8] sm:$0xff] %v1696
                %v1698 = vld [vmem:[%s1652 + $0xb0] sm:$0xff]
                %1699 = vst [vmem:[%s1653 + $0xb0] sm:$0xff] %v1698
                %v1700 = vld [vmem:[%s1652 + $0xb8] sm:$0xff]
                %1701 = vst [vmem:[%s1653 + $0xb8] sm:$0xff] %v1700
                %v1702 = vld [vmem:[%s1652 + $0xc0] sm:$0xff]
                %1703 = vst [vmem:[%s1653 + $0xc0] sm:$0xff] %v1702
                %v1704 = vld [vmem:[%s1652 + $0xc8] sm:$0xff]
                %1705 = vst [vmem:[%s1653 + $0xc8] sm:$0xff] %v1704
                %v1706 = vld [vmem:[%s1652 + $0xd0] sm:$0xff]
                %1707 = vst [vmem:[%s1653 + $0xd0] sm:$0xff] %v1706
                %v1708 = vld [vmem:[%s1652 + $0xd8] sm:$0xff]
                %1709 = vst [vmem:[%s1653 + $0xd8] sm:$0xff] %v1708
                %v1710 = vld [vmem:[%s1652 + $0xe0] sm:$0xff]
                %1711 = vst [vmem:[%s1653 + $0xe0] sm:$0xff] %v1710
                %v1712 = vld [vmem:[%s1652 + $0xe8] sm:$0xff]
                %1713 = vst [vmem:[%s1653 + $0xe8] sm:$0xff] %v1712
                %v1714 = vld [vmem:[%s1652 + $0xf0] sm:$0xff]
                %1715 = vst [vmem:[%s1653 + $0xf0] sm:$0xff] %v1714
                %v1716 = vld [vmem:[%s1652 + $0xf8] sm:$0xff]
                %1717 = vst [vmem:[%s1653 + $0xf8] sm:$0xff] %v1716
                %v1718 = vld [vmem:[%s1652 + $0x100] sm:$0xff]
                %1719 = vst [vmem:[%s1653 + $0x100] sm:$0xff] %v1718
                %v1720 = vld [vmem:[%s1652 + $0x108] sm:$0xff]
                %1721 = vst [vmem:[%s1653 + $0x108] sm:$0xff] %v1720
                %v1722 = vld [vmem:[%s1652 + $0x110] sm:$0xff]
                %1723 = vst [vmem:[%s1653 + $0x110] sm:$0xff] %v1722
                %v1724 = vld [vmem:[%s1652 + $0x118] sm:$0xff]
                %1725 = vst [vmem:[%s1653 + $0x118] sm:$0xff] %v1724
                %v1726 = vld [vmem:[%s1652 + $0x120] sm:$0xff]
                %1727 = vst [vmem:[%s1653 + $0x120] sm:$0xff] %v1726
                %v1728 = vld [vmem:[%s1652 + $0x128] sm:$0xff]
                %1729 = vst [vmem:[%s1653 + $0x128] sm:$0xff] %v1728
                %v1730 = vld [vmem:[%s1652 + $0x130] sm:$0xff]
                %1731 = vst [vmem:[%s1653 + $0x130] sm:$0xff] %v1730
                %v1732 = vld [vmem:[%s1652 + $0x138] sm:$0xff]
                %1733 = vst [vmem:[%s1653 + $0x138] sm:$0xff] %v1732
                %v1734 = vld [vmem:[%s1652 + $0x140] sm:$0xff]
                %1735 = vst [vmem:[%s1653 + $0x140] sm:$0xff] %v1734
                %v1736 = vld [vmem:[%s1652 + $0x148] sm:$0xff]
                %1737 = vst [vmem:[%s1653 + $0x148] sm:$0xff] %v1736
                %v1738 = vld [vmem:[%s1652 + $0x150] sm:$0xff]
                %1739 = vst [vmem:[%s1653 + $0x150] sm:$0xff] %v1738
                %v1740 = vld [vmem:[%s1652 + $0x158] sm:$0xff]
                %1741 = vst [vmem:[%s1653 + $0x158] sm:$0xff] %v1740
                %v1742 = vld [vmem:[%s1652 + $0x160] sm:$0xff]
                %1743 = vst [vmem:[%s1653 + $0x160] sm:$0xff] %v1742
                %v1744 = vld [vmem:[%s1652 + $0x168] sm:$0xff]
                %1745 = vst [vmem:[%s1653 + $0x168] sm:$0xff] %v1744
                %v1746 = vld [vmem:[%s1652 + $0x170] sm:$0xff]
                %1747 = vst [vmem:[%s1653 + $0x170] sm:$0xff] %v1746
                %v1748 = vld [vmem:[%s1652 + $0x178] sm:$0xff]
                %1749 = vst [vmem:[%s1653 + $0x178] sm:$0xff] %v1748
                %v1750 = vld [vmem:[%s1652 + $0x180] sm:$0xff]
                %1751 = vst [vmem:[%s1653 + $0x180] sm:$0xff] %v1750
                %v1752 = vld [vmem:[%s1652 + $0x188] sm:$0xff]
                %1753 = vst [vmem:[%s1653 + $0x188] sm:$0xff] %v1752
                %v1754 = vld [vmem:[%s1652 + $0x190] sm:$0xff]
                %1755 = vst [vmem:[%s1653 + $0x190] sm:$0xff] %v1754
                %v1756 = vld [vmem:[%s1652 + $0x198] sm:$0xff]
                %1757 = vst [vmem:[%s1653 + $0x198] sm:$0xff] %v1756
                %v1758 = vld [vmem:[%s1652 + $0x1a0] sm:$0xff]
                %1759 = vst [vmem:[%s1653 + $0x1a0] sm:$0xff] %v1758
                %v1760 = vld [vmem:[%s1652 + $0x1a8] sm:$0xff]
                %1761 = vst [vmem:[%s1653 + $0x1a8] sm:$0xff] %v1760
                %v1762 = vld [vmem:[%s1652 + $0x1b0] sm:$0xff]
                %1763 = vst [vmem:[%s1653 + $0x1b0] sm:$0xff] %v1762
                %v1764 = vld [vmem:[%s1652 + $0x1b8] sm:$0xff]
                %1765 = vst [vmem:[%s1653 + $0x1b8] sm:$0xff] %v1764
                %v1766 = vld [vmem:[%s1652 + $0x1c0] sm:$0xff]
                %1767 = vst [vmem:[%s1653 + $0x1c0] sm:$0xff] %v1766
                %v1768 = vld [vmem:[%s1652 + $0x1c8] sm:$0xff]
                %1769 = vst [vmem:[%s1653 + $0x1c8] sm:$0xff] %v1768
                %v1770 = vld [vmem:[%s1652 + $0x1d0] sm:$0xff]
                %1771 = vst [vmem:[%s1653 + $0x1d0] sm:$0xff] %v1770
                %v1772 = vld [vmem:[%s1652 + $0x1d8] sm:$0xff]
                %1773 = vst [vmem:[%s1653 + $0x1d8] sm:$0xff] %v1772
                %v1774 = vld [vmem:[%s1652 + $0x1e0] sm:$0xff]
                %1775 = vst [vmem:[%s1653 + $0x1e0] sm:$0xff] %v1774
                %v1776 = vld [vmem:[%s1652 + $0x1e8] sm:$0xff]
                %1777 = vst [vmem:[%s1653 + $0x1e8] sm:$0xff] %v1776
                %v1778 = vld [vmem:[%s1652 + $0x1f0] sm:$0xff]
                %1779 = vst [vmem:[%s1653 + $0x1f0] sm:$0xff] %v1778
                %v1780 = vld [vmem:[%s1652 + $0x1f8] sm:$0xff]
                %1781 = vst [vmem:[%s1653 + $0x1f8] sm:$0xff] %v1780
                %s1782 = sadd.s32 1, %s1651
                %p1783 = scmp.ge.s32.totalorder %s1782, %s1644
                %s1784 = scalar_select %p1783, 0, %s1782
                %s1785 = smul.u32 %s1784, 512
                %s1786 = smul.u32 %s1784, 512
                %s1787 = scalar_lea.vmem %s1624, %s1785 [#allocation2]
                %s1788 = scalar_lea.vmem %s1635, %s1786
              $region61: #{tpu_custom_call.1} parent=55 // loop_footer
                %s1648 = sadd.s32 %s1646, 1
              $region62: #{tpu_custom_call.1} parent=55 // loop_footer_branch
                %1645 = sbr.rel target = $region58
              $region63: #{tpu_custom_call.1} parent=55 // loop_exit
                _
              %s1789 = sshrl.u32 %s1631, 6
              %s1790 = sand.u32 %s1631, 63
              %s1791 = smul.u32 %s1789, 64
              %s1792 = smul.u32 8, %s1791
              %s1793 = scalar_lea.vmem %s1624, %s1792 [#allocation2]
              %s1794 = smul.u32 8, %s1791
              %s1795 = scalar_lea.vmem %s1635, %s1794
              // While loop
              $region64: #{tpu_custom_call.1} parent=55 // loop_pre_header
                _
              $region65: #{tpu_custom_call.1} parent=55 // loop_header
                %s1797 = sphi 0, %s1799
                %p1798 = scmp.ge.s32.totalorder %s1797, %s1790
                %s1802 = sphi 0, %s1809
                %s1803 = sphi %s1793, %s1812
                %s1804 = sphi %s1795, %s1813
              $region66: #{tpu_custom_call.1} parent=55 // loop_header_branch
                %1801 = sbr.rel (%p1798) target = $region70
              $region67: #{tpu_custom_call.1} parent=55 // loop_body
                %v1805 = vld [vmem:[%s1803] sm:$0xff]
                %1806 = vst [vmem:[%s1804] sm:$0xff] %v1805
                %s1807 = sadd.s32 1, %s1802
                %p1808 = scmp.ge.s32.totalorder %s1807, %s1790
                %s1809 = scalar_select %p1808, 0, %s1807
                %s1810 = smul.u32 %s1809, 8
                %s1811 = smul.u32 %s1809, 8
                %s1812 = scalar_lea.vmem %s1793, %s1810 [#allocation2]
                %s1813 = scalar_lea.vmem %s1795, %s1811
              $region68: #{tpu_custom_call.1} parent=55 // loop_footer
                %s1799 = sadd.s32 %s1797, 1
              $region69: #{tpu_custom_call.1} parent=55 // loop_footer_branch
                %1796 = sbr.rel target = $region65
              $region70: #{tpu_custom_call.1} parent=55 // loop_exit
                _
            $region56: #{tpu_custom_call.1} parent=47 // pred_fallthru
              _
          $region48: #{tpu_custom_call.1} parent=43 // pred_fallthru
            _
          %1988 = vnop
        $region44: #{tpu_custom_call.1} parent=39 // pred_fallthru
          _
      $region40: #{tpu_custom_call.1} parent=5 // pred_fallthru
        _
      %p1989 = scmp.le.s32.totalorder 2, %s11
      // Predicated region
      $region93: #{tpu_custom_call.1} parent=5 // pred_check
        %p1990 = pneg %p1989
      $region94: #{tpu_custom_call.1} parent=5 // pred_check_branch
        %1992 = sbr.rel (%p1990) target = $region96
      $region95: #{tpu_custom_call.1} parent=5 // pred_region
        %s1993 = ssub.s32 %s11, 2
        // Predicated region
        $region97: #{tpu_custom_call.1} parent=95 // pred_check
          %p1994 = pneg %p150
        $region98: #{tpu_custom_call.1} parent=95 // pred_check_branch
          %1996 = sbr.rel (%p1994) target = $region100
        $region99: #{tpu_custom_call.1} parent=95 // pred_region
          %s1997 = sand.u32 %s135, 1
          %s1998 = sand.u32 %s135, 1
          %s1999 = smul.addr %s1998, 512
          %s2000 = scalar_lea.vmem [#allocation2], %s1999
        $region100: #{tpu_custom_call.1} parent=95 // pred_fallthru
          _
      $region96: #{tpu_custom_call.1} parent=5 // pred_fallthru
        _
    $region6: #{tpu_custom_call.1} parent=1 // loop_footer
      %s15 = sadd.s32 1, %s11
    $region7: #{tpu_custom_call.1} parent=1 // loop_footer_branch
      %10 = sbr.rel target = $region3
    $region8: #{tpu_custom_call.1} parent=1 // loop_exit
      _

</llo_original>
